<compile_context>
chip_gen: v6e
topology: v6e:2x2x1
jax: 0.10.0
libtpu: 0.0.40
codegen_flags: <defaults>
</compile_context>

<pallas_src>
import jax
import jax.numpy as jnp
from jax.experimental import pallas as pl
from jax.experimental.pallas import tpu as pltpu


def _self_attn_kernel(vec_ref, wq_ref, bq_ref, wl_ref, bl_ref, out_ref):
    # vec_ref: (BT, S, D)  batch tile of inputs        (VMEM)
    # wq_ref:  (H, D)      Wq, un-transposed (PyTorch layout)
    # bq_ref:  (1, H)      Wq bias
    # wl_ref:  (1, H)      final linear weight row
    # bl_ref:  (1,)        final linear bias           (SMEM scalar)
    # out_ref: (BT, H)     lane-contiguous output slab
    BT, S, D = vec_ref.shape
    H = wq_ref.shape[0]

    # One fat MXU call for the whole batch tile:
    #   (BT*S, D) x (H, D)^T -> (BT*S, H)
    # (S == 8 keeps this reshape sublane-aligned / layout-free.)
    v2 = vec_ref[...].reshape(BT * S, D)
    q = jax.lax.dot_general(
        v2, wq_ref[...],
        dimension_numbers=(((1,), (1,)), ((), ())),
        preferred_element_type=jnp.float32,
    ) + bq_ref[...]
    q3 = q.reshape(BT, S, H)

    # Batched Gram over the sequence axis (k == q in this module):
    #   g[b, x, y] = sum_s q[b, s, x] * q[b, s, y]
    # TODO(synk): at H=D=32 this lowers to BT small (32x8x32) MXU matmuls; the
    # reviewed alternatives (VPU outer-product accumulation, pre-transposed
    # LHS) all require a per-(b,s) lanes->sublanes relayout of comparable cost
    # at these sizes, so the straightforward batched dot is kept.
    g = jax.lax.dot_general(
        q3, q3,
        dimension_numbers=(((1,), (1,)), ((0,), (0,))),
        preferred_element_type=jnp.float32,
    )
    g = jnp.maximum(g, 0.0)

    # hidden -> 1 projection as VPU mul + XLU lane reduction (no N=1 matmul):
    # (BT, H, H) * (1, H) --sum over last axis--> (BT, H), + scalar bias.
    o = jnp.sum(g * wl_ref[...], axis=-1) + bl_ref[0]
    out_ref[...] = o.astype(out_ref.dtype)


# Cap on the batch tile: DMA-amortization returns flatten out around 512-1024
# rows (measured tiled-copy: 512 -> 85%, 1024 -> 86% of HBM roofline) and this
# also bounds the lowered size of the per-tile batched Gram.
_MAX_BATCH_TILE = 1024


def _vmem_capacity_bytes():
    """Per-TensorCore VMEM capacity, with a conservative fallback (v7x)."""
    try:
        info = pltpu.get_tpu_info()
        cap = getattr(info, "vmem_capacity_bytes", None)
        if cap:
            return int(cap)
    except Exception:
        pass
    return 64 * 1024 * 1024


def _per_element_vmem_bytes(S, D, H):
    # f32 bytes per batch element of the per-step working set:
    #   2*S*D  double-buffered input,  S*H  q intermediate,
    #   2*H*H  g + relu/mul temp,      2*H  double-buffered output row.
    return 4 * (2 * S * D + S * H + 2 * H * H + 2 * H)


def _choose_tiling(B, S, D, H):
    """Pick (batch_tile, n_grid_steps)."""
    per_elem = _per_element_vmem_bytes(S, D, H)
    budget = min(_vmem_capacity_bytes() // 2, 48 * 1024 * 1024)
    bt_max = min(_MAX_BATCH_TILE, max(8, (budget // per_elem) // 8 * 8))
    if B <= bt_max:
        return B, 1                     # one fat step (best for 1-TC v5e/v6e)
    n = -(-B // bt_max)
    if n % 2:
        n += 1                          # even #steps keeps both v7x TCs fed
    bt = -(-B // n)
    bt = ((bt + 7) // 8) * 8            # sublane-aligned (BT, H) out block
    return bt, n


def self_attn_forward(vec, wq, bq, w_lin, b_lin, *, batch_tile=None):
    """vec: [B, S, D] f32. wq: [H, D], bq: [H], w_lin: [1, H], b_lin: [1]."""
    B, S, D = vec.shape
    H = wq.shape[0]

    if batch_tile is None:
        bt, n_tiles = _choose_tiling(B, S, D, H)
    else:
        bt = min(int(batch_tile), B)
        n_tiles = -(-B // bt)
        assert bt % 8 == 0 or n_tiles == 1, (
            "explicit batch_tile must be a multiple of 8 unless it covers the "
            "whole batch (sublane alignment of the output block)")

    B_pad = bt * n_tiles
    if B_pad != B:
        # Zero-pad the batch; padded rows are independent garbage sliced off
        # below (there is no cross-batch interaction in this op).
        vec = jnp.pad(vec, ((0, B_pad - B), (0, 0), (0, 0)))

    bq2 = bq.reshape(1, H)              # (1, H), resident in VMEM
    wl2 = w_lin.reshape(1, H)           # (1, H) row, resident in VMEM
    bl1 = b_lin.reshape(1)              # (1,)  scalar, lives in SMEM

    per_elem = _per_element_vmem_bytes(S, D, H)
    weights_bytes = 4 * (H * D + 3 * H + 1)
    working_set = per_elem * bt + weights_bytes
    vmem_limit = int(min(_vmem_capacity_bytes() * 3 // 4,
                         max(32 * 1024 * 1024, 3 * working_set // 2)))

    flops = B_pad * (2 * S * D * H + 2 * S * H * H + 2 * H * H)
    bytes_accessed = 4 * (B_pad * S * D + H * D + 3 * H + 1 + B_pad * H)

    out = pl.pallas_call(
        _self_attn_kernel,
        out_shape=jax.ShapeDtypeStruct((B_pad, H), jnp.float32),
        grid_spec=pltpu.PrefetchScalarGridSpec(
            num_scalar_prefetch=0,
            grid=(n_tiles,),
            in_specs=[
                pl.BlockSpec((bt, S, D), lambda b: (b, 0, 0)),
                pl.BlockSpec((H, D), lambda b: (0, 0)),
                pl.BlockSpec((1, H), lambda b: (0, 0)),
                pl.BlockSpec((1, H), lambda b: (0, 0)),
                pl.BlockSpec(memory_space=pltpu.MemorySpace.SMEM),
            ],
            out_specs=pl.BlockSpec((bt, H), lambda b: (b, 0)),
        ),
        compiler_params=pltpu.CompilerParams(
            dimension_semantics=("parallel",),
            vmem_limit_bytes=vmem_limit,
        ),
        cost_estimate=pl.CostEstimate(
            flops=flops, transcendentals=0, bytes_accessed=bytes_accessed),
    )(vec, wq, bq2, wl2, bl1)

    return out[:B] if B_pad != B else out


def self_attn_reference(vec, wq, bq, w_lin, b_lin):
    """Plain-JAX reference matching the PyTorch forward."""
    q = jnp.einsum('bsd,hd->bsh', vec, wq) + bq
    k = q  # the module applies wq to both q and k
    g = jnp.einsum('bsx,bsy->bxy', q, k)
    g = jnp.maximum(g, 0.0)
    o = jnp.einsum('bxy,oy->bxo', g, w_lin) + b_lin
    return o.reshape(vec.shape[0], -1)


if __name__ == "__main__":
    # Small shapes consistent with the module: vec is [B, S, in_dim].
    B, S, in_dim, hidden_dim = 16, 8, 32, 32

    key = jax.random.PRNGKey(0)
    k_vec, k_wq, k_bq, k_wl, k_bl = jax.random.split(key, 5)

    vec = jax.random.normal(k_vec, (B, S, in_dim), dtype=jnp.float32)

    # Deterministic parameter init (Linear-like uniform ranges).
    bound_q = 1.0 / (in_dim ** 0.5)
    wq = jax.random.uniform(k_wq, (hidden_dim, in_dim), jnp.float32, -bound_q, bound_q)
    bq = jax.random.uniform(k_bq, (hidden_dim,), jnp.float32, -bound_q, bound_q)
    bound_l = 1.0 / (hidden_dim ** 0.5)
    w_lin = jax.random.uniform(k_wl, (1, hidden_dim), jnp.float32, -bound_l, bound_l)
    b_lin = jax.random.uniform(k_bl, (1,), jnp.float32, -bound_l, bound_l)
    # NOTE: wk / LayerNorm params (nq, nk) exist in __init__ but are unused in
    # forward, so they are intentionally not materialized here.

    # 1) Default path: single fat grid step.
    out = jax.block_until_ready(self_attn_forward(vec, wq, bq, w_lin, b_lin))
    ref = self_attn_reference(vec, wq, bq, w_lin, b_lin)
    assert out.shape == (B, hidden_dim)
    assert jnp.allclose(out, ref, rtol=1e-3, atol=1e-3), "mismatch (single tile)"

    # 2) Multi-step + zero-padded tail path (B=20 not divisible by the tile).
    B2 = 20
    vec2 = jax.random.normal(jax.random.PRNGKey(1), (B2, S, in_dim), jnp.float32)
    out2 = jax.block_until_ready(
        self_attn_forward(vec2, wq, bq, w_lin, b_lin, batch_tile=8))
    ref2 = self_attn_reference(vec2, wq, bq, w_lin, b_lin)
    assert out2.shape == (B2, hidden_dim)
    assert jnp.allclose(out2, ref2, rtol=1e-3, atol=1e-3), "mismatch (padded tail)"

    print("KERNEL_OK")
</pallas_src>

<mosaic_0001>
module attributes {stable_mosaic.version = 11 : i64} {
  func.func @_self_attn_kernel(%arg0: i32, %arg1: memref<16x8x32xf32, #tpu.memory_space<vmem>>, %arg2: memref<32x32xf32, #tpu.memory_space<vmem>>, %arg3: memref<1x32xf32, #tpu.memory_space<vmem>>, %arg4: memref<1x32xf32, #tpu.memory_space<vmem>>, %arg5: memref<1xf32, #tpu.memory_space<smem>>, %arg6: memref<16x32xf32, #tpu.memory_space<vmem>>) attributes {dimension_semantics = [#tpu.dimension_semantics<parallel>], iteration_bounds = array<i64: 1>, scalar_prefetch = 0 : i64, scratch_operands = 0 : i64, tpu.core_type = #tpu.core_type<tc>, window_params = [{transform_indices = @transform_0, window_bounds = array<i64: 16, 8, 32>}, {pipeline_mode = #tpu.pipeline_mode<synchronous>, transform_indices = @transform_1, window_bounds = array<i64: 32, 32>}, {pipeline_mode = #tpu.pipeline_mode<synchronous>, transform_indices = @transform_2, window_bounds = array<i64: 1, 32>}, {pipeline_mode = #tpu.pipeline_mode<synchronous>, transform_indices = @transform_3, window_bounds = array<i64: 1, 32>}, {transform_indices = @transform_4, window_bounds = array<i64: 1>}, {transform_indices = @transform_5, window_bounds = array<i64: 16, 32>}]} {
    %c0 = arith.constant 0 : index
    %c0_0 = arith.constant 0 : index
    %c0_1 = arith.constant 0 : index
    %0 = vector.load %arg1[%c0, %c0_0, %c0_1] : memref<16x8x32xf32, #tpu.memory_space<vmem>>, vector<16x8x32xf32>
    %1 = vector.shape_cast %0 : vector<16x8x32xf32> to vector<128x32xf32>
    %c0_2 = arith.constant 0 : index
    %c0_3 = arith.constant 0 : index
    %2 = vector.load %arg2[%c0_2, %c0_3] : memref<32x32xf32, #tpu.memory_space<vmem>>, vector<32x32xf32>
    %cst = arith.constant dense<0.000000e+00> : vector<128x32xf32>
    %3 = tpu.matmul %1, %2, %cst {dimension_numbers = #tpu.dot_dimension_numbers<[1], [1], [0], [0], [0, 0, 1, 0], [], []>} : vector<128x32xf32>, vector<32x32xf32>, vector<128x32xf32> -> vector<128x32xf32>
    %c0_4 = arith.constant 0 : index
    %c0_5 = arith.constant 0 : index
    %4 = vector.load %arg3[%c0_4, %c0_5] : memref<1x32xf32, #tpu.memory_space<vmem>>, vector<1x32xf32>
    %5 = vector.broadcast %4 : vector<1x32xf32> to vector<128x32xf32>
    %6 = arith.addf %3, %5 : vector<128x32xf32>
    %7 = vector.shape_cast %6 : vector<128x32xf32> to vector<16x8x32xf32>
    %cst_6 = arith.constant dense<0.000000e+00> : vector<16x32x32xf32>
    %8 = tpu.matmul %7, %7, %cst_6 {dimension_numbers = #tpu.dot_dimension_numbers<[1], [1], [2], [2], [0, 0, 0, 2, 1, 2], [0], [0]>} : vector<16x8x32xf32>, vector<16x8x32xf32>, vector<16x32x32xf32> -> vector<16x32x32xf32>
    %cst_7 = arith.constant 0.000000e+00 : f32
    %9 = vector.broadcast %cst_7 : f32 to vector<16x32x32xf32>
    %10 = arith.maximumf %8, %9 : vector<16x32x32xf32>
    %c0_8 = arith.constant 0 : index
    %c0_9 = arith.constant 0 : index
    %11 = vector.load %arg4[%c0_8, %c0_9] : memref<1x32xf32, #tpu.memory_space<vmem>>, vector<1x32xf32>
    %12 = vector.shape_cast %11 : vector<1x32xf32> to vector<1x1x32xf32>
    %13 = vector.broadcast %12 : vector<1x1x32xf32> to vector<16x32x32xf32>
    %14 = arith.mulf %10, %13 : vector<16x32x32xf32>
    %cst_10 = arith.constant dense<0.000000e+00> : vector<16x32xf32>
    %15 = vector.multi_reduction <add>, %14, %cst_10 [2] : vector<16x32x32xf32> to vector<16x32xf32>
    %c0_11 = arith.constant 0 : index
    %16 = memref.load %arg5[%c0_11] : memref<1xf32, #tpu.memory_space<smem>>
    %17 = vector.broadcast %16 : f32 to vector<16x32xf32>
    %18 = arith.addf %15, %17 : vector<16x32xf32>
    %c0_12 = arith.constant 0 : index
    %c0_13 = arith.constant 0 : index
    %19 = vector.load %arg6[%c0_12, %c0_13] : memref<16x32xf32, #tpu.memory_space<vmem>>, vector<16x32xf32>
    tpu.vector_store %arg6[%c0_12, %c0_13], %18 {strides = array<i32>} : memref<16x32xf32, #tpu.memory_space<vmem>>, vector<16x32xf32>,
    return
  }
  func.func @transform_0(%arg0: i32) -> (i32, i32, i32) {
    %c0_i32 = arith.constant 0 : i32
    %c0_i32_0 = arith.constant 0 : i32
    %c0_i32_1 = arith.constant 0 : i32
    return %arg0, %c0_i32, %c0_i32_0 : i32, i32, i32
  }
  func.func @transform_1(%arg0: i32) -> (i32, i32) {
    %c0_i32 = arith.constant 0 : i32
    %c0_i32_0 = arith.constant 0 : i32
    %c0_i32_1 = arith.constant 0 : i32
    return %c0_i32, %c0_i32_0 : i32, i32
  }
  func.func @transform_2(%arg0: i32) -> (i32, i32) {
    %c0_i32 = arith.constant 0 : i32
    %c0_i32_0 = arith.constant 0 : i32
    %c0_i32_1 = arith.constant 0 : i32
    return %c0_i32, %c0_i32_0 : i32, i32
  }
  func.func @transform_3(%arg0: i32) -> (i32, i32) {
    %c0_i32 = arith.constant 0 : i32
    %c0_i32_0 = arith.constant 0 : i32
    %c0_i32_1 = arith.constant 0 : i32
    return %c0_i32, %c0_i32_0 : i32, i32
  }
  func.func @transform_4(%arg0: i32) -> i32 {
    %c0_i32 = arith.constant 0 : i32
    %c0_i32_0 = arith.constant 0 : i32
    return %c0_i32 : i32
  }
  func.func @transform_5(%arg0: i32) -> (i32, i32) {
    %c0_i32 = arith.constant 0 : i32
    %c0_i32_0 = arith.constant 0 : i32
    return %arg0, %c0_i32 : i32, i32
  }
}

</mosaic_0001>

<llo_original>
// kernel: tpu_custom_call.1
$region0: #{tpu_custom_call.1}
  #allocation0 [shape = 'u32[]', space=smem, size = 0x4, offset = 0x4, fixed_abs, tag = 'smem constant byte address 0x4 - core index']
  #allocation1 [shape = 'u32[144,128]{1,0:T(1,128)}', space=vmem, size = 0x12000, scoped, tag = 'internal scratch']
  #allocation2 [shape = 'f32[1]{0:T(128)S(6)}', space=smem, size = 0x200, scoped, tag = 'scoped memory for tpu_custom_call.1']
  %s0 = inlined_call_operand.hbm [shape: f32[16,8,32], index: 0, kind: input, shape index: {}]
  %s1 = inlined_call_operand.hbm [shape: f32[32,32], index: 1, kind: input, shape index: {}]
  %s2 = inlined_call_operand.vmem [shape: f32[1,32], index: 2, kind: input, shape index: {}]
  %s3 = inlined_call_operand.vmem [shape: f32[1,32], index: 3, kind: input, shape index: {}]
  %s4 = inlined_call_operand.<no memory space> [shape: f32[1], index: 4, kind: input, shape index: {}]
  %s5 = inlined_call_operand.hbm [shape: f32[16,32], index: 5, kind: output, shape index: {}]
  %s6 = sld [smem:[#allocation0]]
  $region38: #{tpu_custom_call.1} parent=0
    _
  %s8 = ssub.s32 1, %s6
  %s9 = scalar_select 0, %s8, %s6
  %10 = sst [smem:[#allocation2]] %s4
  $region1: #{tpu_custom_call.1} parent=0
    #allocation3 [shape = 'u8[65536]{0}', space=vmem, size = 0x10000, scoped, tag = 'input window, operand 0, single buffered']
    #allocation4 [shape = 's32[1]{0}', space=sflag, size = 0x4, scoped, tag = 'scoped memory for tpu_custom_call.1']
    #allocation5 [shape = 's32[1]{0}', space=sflag, size = 0x4, scoped, tag = 'scoped memory for tpu_custom_call.1']
    #allocation6 [shape = 'u8[16384]{0}', space=vmem, size = 0x4000, scoped, tag = 'input window, operand 1, single buffered']
    #allocation7 [shape = 's32[1]{0}', space=sflag, size = 0x4, scoped, tag = 'scoped memory for tpu_custom_call.1']
    #allocation8 [shape = 'u8[8192]{0}', space=vmem, size = 0x2000, scoped, tag = 'output window, operand 0, single buffered']
    %11 = vsyncpa [#allocation4], 0
    %12 = vsyncpa [#allocation7], 0
    %13 = vsyncpa [#allocation5], 0
    // Predicated region
    $region2: #{tpu_custom_call.1} parent=1 // pred_check
      _
    $region3: #{tpu_custom_call.1} parent=1 // pred_check_branch
      %15 = sbr.rel (0) target = $region5
    $region4: #{tpu_custom_call.1} parent=1 // pred_region
      %s17 = ssub.s32 2048, 2048
      %18 = vsyncadd [#allocation4], %s17
      %s19 = sshll.u32 [#allocation3], 4
      %s20 = int_to_ptr.vmem [resolvable:$true] %s19
      %25 = dma.hbm_to_vmem [thread:$0]  %s0, 2048, %s20, [#allocation4], 128, 128, 8
    $region5: #{tpu_custom_call.1} parent=1 // pred_fallthru
      _
    // Predicated region
    $region6: #{tpu_custom_call.1} parent=1 // pred_check
      _
    $region7: #{tpu_custom_call.1} parent=1 // pred_check_branch
      %27 = sbr.rel (0) target = $region9
    $region8: #{tpu_custom_call.1} parent=1 // pred_region
      %s29 = ssub.s32 512, 512
      %30 = vsyncadd [#allocation7], %s29
      %s31 = sshll.u32 [#allocation6], 4
      %s32 = int_to_ptr.vmem [resolvable:$true] %s31
      %37 = dma.hbm_to_vmem [thread:$0]  %s1, 512, %s32, [#allocation7], 128, 128, 8
    $region9: #{tpu_custom_call.1} parent=1 // pred_fallthru
      _
    // Predicated region
    $region10: #{tpu_custom_call.1} parent=1 // pred_check
      _
    $region11: #{tpu_custom_call.1} parent=1 // pred_check_branch
      %39 = sbr.rel (0) target = $region13
    $region12: #{tpu_custom_call.1} parent=1 // pred_region
      _
    $region13: #{tpu_custom_call.1} parent=1 // pred_fallthru
      _
    // Predicated region
    $region14: #{tpu_custom_call.1} parent=1 // pred_check
      _
    $region15: #{tpu_custom_call.1} parent=1 // pred_check_branch
      %41 = sbr.rel (0) target = $region17
    $region16: #{tpu_custom_call.1} parent=1 // pred_region
      _
    $region17: #{tpu_custom_call.1} parent=1 // pred_fallthru
      _
    // Predicated region
    $region18: #{tpu_custom_call.1} parent=1 // pred_check
      _
    $region19: #{tpu_custom_call.1} parent=1 // pred_check_branch
      %43 = sbr.rel (0) target = $region21
    $region20: #{tpu_custom_call.1} parent=1 // pred_region
      _
    $region21: #{tpu_custom_call.1} parent=1 // pred_fallthru
      _
    // Predicated region
    $region22: #{tpu_custom_call.1} parent=1 // pred_check
      _
    $region23: #{tpu_custom_call.1} parent=1 // pred_check_branch
      %45 = sbr.rel (0) target = $region25
    $region24: #{tpu_custom_call.1} parent=1 // pred_region
      %46 = dma.done [#allocation4], 2048
    $region25: #{tpu_custom_call.1} parent=1 // pred_fallthru
      _
    // Predicated region
    $region26: #{tpu_custom_call.1} parent=1 // pred_check
      _
    $region27: #{tpu_custom_call.1} parent=1 // pred_check_branch
      %48 = sbr.rel (0) target = $region29
    $region28: #{tpu_custom_call.1} parent=1 // pred_region
      %49 = dma.done [#allocation7], 512
    $region29: #{tpu_custom_call.1} parent=1 // pred_fallthru
      _
    %v50 = vld [vmem:[#allocation3] sm:$0xff]
    %v51 = vld [vmem:[#allocation3 + $0x8] sm:$0xff]
    %v52 = vld [vmem:[#allocation3 + $0x10] sm:$0xff]
    %v53 = vld [vmem:[#allocation3 + $0x18] sm:$0xff]
    %v54 = vld [vmem:[#allocation3 + $0x20] sm:$0xff]
    %v55 = vld [vmem:[#allocation3 + $0x28] sm:$0xff]
    %v56 = vld [vmem:[#allocation3 + $0x30] sm:$0xff]
    %v57 = vld [vmem:[#allocation3 + $0x38] sm:$0xff]
    %v58 = vld [vmem:[#allocation3 + $0x40] sm:$0xff]
    %v59 = vld [vmem:[#allocation3 + $0x48] sm:$0xff]
    %v60 = vld [vmem:[#allocation3 + $0x50] sm:$0xff]
    %v61 = vld [vmem:[#allocation3 + $0x58] sm:$0xff]
    %v62 = vld [vmem:[#allocation3 + $0x60] sm:$0xff]
    %v63 = vld [vmem:[#allocation3 + $0x68] sm:$0xff]
    %v64 = vld [vmem:[#allocation3 + $0x70] sm:$0xff]
    %v65 = vld [vmem:[#allocation3 + $0x78] sm:$0xff]
    %v66 = vld [vmem:[#allocation6] sm:$0xff]
    %v67 = vld [vmem:[#allocation6 + $0x8] sm:$0xff]
    %v68 = vld [vmem:[#allocation6 + $0x10] sm:$0xff]
    %v69 = vld [vmem:[#allocation6 + $0x18] sm:$0xff]
    %v70 = vld [vmem:[%s2] sm:$0x1]
    %v72 = vlaneseq
    %v73 = vshrl.u32 %v72, 7
    %v74 = vsub.s32 0, %v73
    %v75 = vrot.slane %v70, %v74
    %vm77 = vcmask 261120
    %v79 = vsel %vm77, %v50, 0
    %v82 = vsel %vm77, %v51, 0
    %v85 = vsel %vm77, %v52, 0
    %v88 = vsel %vm77, %v53, 0
    %v91 = vsel %vm77, %v54, 0
    %v94 = vsel %vm77, %v55, 0
    %v97 = vsel %vm77, %v56, 0
    %v100 = vsel %vm77, %v57, 0
    %v103 = vsel %vm77, %v58, 0
    %v106 = vsel %vm77, %v59, 0
    %v109 = vsel %vm77, %v60, 0
    %v112 = vsel %vm77, %v61, 0
    %v115 = vsel %vm77, %v62, 0
    %v118 = vsel %vm77, %v63, 0
    %v121 = vsel %vm77, %v64, 0
    %v124 = vsel %vm77, %v65, 0
    %v127 = vsel %vm77, %v66, 0
    %v130 = vsel %vm77, %v67, 0
    %v133 = vsel %vm77, %v68, 0
    %v136 = vsel %vm77, %v69, 0
    %138 = vmatprep.subr.mxu0 0.0
    %139 = vmatpush1.xpose.msra.mxu0 0.0
    %140 = vmatprep.subr.mxu0 0.0
    %141 = vmatpush1.xpose.msra.mxu0 0.0
    %142 = vmatprep.subr.mxu0 0.0
    %143 = vmatpush1.xpose.msra.mxu0 0.0
    %144 = vmatprep.subr.mxu0 0.0
    %145 = vmatpush1.xpose.msra.mxu0 0.0
    %146 = vmatprep.subr.mxu0 0.0
    %147 = vmatpush1.xpose.msra.mxu0 0.0
    %148 = vmatprep.subr.mxu0 0.0
    %149 = vmatpush1.xpose.msra.mxu0 0.0
    %150 = vmatprep.subr.mxu0 0.0
    %151 = vmatpush1.xpose.msra.mxu0 0.0
    %152 = vmatprep.subr.mxu0 0.0
    %153 = vmatpush1.xpose.msra.mxu0 0.0
    %154 = vmatprep.subr.mxu0 0.0
    %155 = vmatpush1.xpose.msra.mxu0 0.0
    %156 = vmatprep.subr.mxu0 0.0
    %157 = vmatpush1.xpose.msra.mxu0 0.0
    %158 = vmatprep.subr.mxu0 0.0
    %159 = vmatpush1.xpose.msra.mxu0 0.0
    %160 = vmatprep.subr.mxu0 0.0
    %161 = vmatpush1.xpose.msra.mxu0 0.0
    %162 = vmatprep.subr.mxu0 0.0
    %163 = vmatpush1.xpose.msra.mxu0 %v136
    %164 = vmatprep.subr.mxu0 0.0
    %165 = vmatpush1.xpose.msra.mxu0 %v133
    %166 = vmatprep.subr.mxu0 0.0
    %167 = vmatpush1.xpose.msra.mxu0 %v130
    %168 = vmatprep.subr.mxu0 0.0
    %169 = vmatpush1.xpose.msra.mxu0 %v127
    %170 = vmatprep.subr.mxu0 0.0
    %171 = vmatpush2.xpose.msra.mxu0 0.0
    %172 = vmatprep.subr.mxu0 0.0
    %173 = vmatpush2.xpose.msra.mxu0 0.0
    %174 = vmatprep.subr.mxu0 0.0
    %175 = vmatpush2.xpose.msra.mxu0 0.0
    %176 = vmatprep.subr.mxu0 0.0
    %177 = vmatpush2.xpose.msra.mxu0 0.0
    %178 = vmatprep.subr.mxu0 0.0
    %179 = vmatpush2.xpose.msra.mxu0 0.0
    %180 = vmatprep.subr.mxu0 0.0
    %181 = vmatpush2.xpose.msra.mxu0 0.0
    %182 = vmatprep.subr.mxu0 0.0
    %183 = vmatpush2.xpose.msra.mxu0 0.0
    %184 = vmatprep.subr.mxu0 0.0
    %185 = vmatpush2.xpose.msra.mxu0 0.0
    %186 = vmatprep.subr.mxu0 0.0
    %187 = vmatpush2.xpose.msra.mxu0 0.0
    %188 = vmatprep.subr.mxu0 0.0
    %189 = vmatpush2.xpose.msra.mxu0 0.0
    %190 = vmatprep.subr.mxu0 0.0
    %191 = vmatpush2.xpose.msra.mxu0 0.0
    %192 = vmatprep.subr.mxu0 0.0
    %193 = vmatpush2.xpose.msra.mxu0 0.0
    %194 = vmatprep.subr.mxu0 0.0
    %195 = vmatpush2.xpose.msra.mxu0 0.0
    %196 = vmatprep.subr.mxu0 0.0
    %197 = vmatpush2.xpose.msra.mxu0 0.0
    %198 = vmatprep.subr.mxu0 0.0
    %199 = vmatpush2.xpose.msra.mxu0 0.0
    %200 = vmatprep.subr.mxu0 0.0
    %201 = vmatpush2.xpose.msra.mxu0 0.0
    %202 = vmatprep.mubr.f32.mxu0 0.0
    %203 = vmatmul.mubr.f32.gmra.mxu0 %v79
    %v204 = vpop.f32.mrf.mxu0
    %v205 = vadd.f32 %v75, %v204
    %v206 = vpop.f32.mrf.mxu0
    %207 = vmatprep.mubr.f32.mxu0 0.0
    %208 = vmatmul.mubr.f32.gmra.mxu0 %v82
    %v209 = vpop.f32.mrf.mxu0
    %v210 = vadd.f32 %v75, %v209
    %v211 = vpop.f32.mrf.mxu0
    %212 = vmatprep.mubr.f32.mxu0 0.0
    %213 = vmatmul.mubr.f32.gmra.mxu0 %v85
    %v214 = vpop.f32.mrf.mxu0
    %v215 = vadd.f32 %v75, %v214
    %v216 = vpop.f32.mrf.mxu0
    %217 = vmatprep.mubr.f32.mxu0 0.0
    %218 = vmatmul.mubr.f32.gmra.mxu0 %v88
    %v219 = vpop.f32.mrf.mxu0
    %v220 = vadd.f32 %v75, %v219
    %v221 = vpop.f32.mrf.mxu0
    %222 = vmatprep.mubr.f32.mxu0 0.0
    %223 = vmatmul.mubr.f32.gmra.mxu0 %v91
    %v224 = vpop.f32.mrf.mxu0
    %v225 = vadd.f32 %v75, %v224
    %v226 = vpop.f32.mrf.mxu0
    %227 = vmatprep.mubr.f32.mxu0 0.0
    %228 = vmatmul.mubr.f32.gmra.mxu0 %v94
    %v229 = vpop.f32.mrf.mxu0
    %v230 = vadd.f32 %v75, %v229
    %v231 = vpop.f32.mrf.mxu0
    %232 = vmatprep.mubr.f32.mxu0 0.0
    %233 = vmatmul.mubr.f32.gmra.mxu0 %v97
    %v234 = vpop.f32.mrf.mxu0
    %v235 = vadd.f32 %v75, %v234
    %v236 = vpop.f32.mrf.mxu0
    %237 = vmatprep.mubr.f32.mxu0 0.0
    %238 = vmatmul.mubr.f32.gmra.mxu0 %v100
    %v239 = vpop.f32.mrf.mxu0
    %v240 = vadd.f32 %v75, %v239
    %v241 = vpop.f32.mrf.mxu0
    %242 = vmatprep.mubr.f32.mxu0 0.0
    %243 = vmatmul.mubr.f32.gmra.mxu0 %v103
    %v244 = vpop.f32.mrf.mxu0
    %v245 = vadd.f32 %v75, %v244
    %v246 = vpop.f32.mrf.mxu0
    %247 = vmatprep.mubr.f32.mxu0 0.0
    %248 = vmatmul.mubr.f32.gmra.mxu0 %v106
    %v249 = vpop.f32.mrf.mxu0
    %v250 = vadd.f32 %v75, %v249
    %v251 = vpop.f32.mrf.mxu0
    %252 = vmatprep.mubr.f32.mxu0 0.0
    %253 = vmatmul.mubr.f32.gmra.mxu0 %v109
    %v254 = vpop.f32.mrf.mxu0
    %v255 = vadd.f32 %v75, %v254
    %v256 = vpop.f32.mrf.mxu0
    %257 = vmatprep.mubr.f32.mxu0 0.0
    %258 = vmatmul.mubr.f32.gmra.mxu0 %v112
    %v259 = vpop.f32.mrf.mxu0
    %v260 = vadd.f32 %v75, %v259
    %v261 = vpop.f32.mrf.mxu0
    %262 = vmatprep.mubr.f32.mxu0 0.0
    %263 = vmatmul.mubr.f32.gmra.mxu0 %v115
    %v264 = vpop.f32.mrf.mxu0
    %v265 = vadd.f32 %v75, %v264
    %v266 = vpop.f32.mrf.mxu0
    %267 = vmatprep.mubr.f32.mxu0 0.0
    %268 = vmatmul.mubr.f32.gmra.mxu0 %v118
    %v269 = vpop.f32.mrf.mxu0
    %v270 = vadd.f32 %v75, %v269
    %v271 = vpop.f32.mrf.mxu0
    %272 = vmatprep.mubr.f32.mxu0 0.0
    %273 = vmatmul.mubr.f32.gmra.mxu0 %v121
    %v274 = vpop.f32.mrf.mxu0
    %v275 = vadd.f32 %v75, %v274
    %v276 = vpop.f32.mrf.mxu0
    %277 = vmatprep.mubr.f32.mxu0 0.0
    %278 = vmatmul.mubr.f32.gmra.mxu0 %v124
    %v279 = vpop.f32.mrf.mxu0
    %v280 = vadd.f32 %v75, %v279
    %v281 = vpop.f32.mrf.mxu0
    %282 = vdwg.mxu0
    %283 = vxpose.xlu0.b32.start [1/16] %v205, 128
    %284 = vxpose.xlu0.b32.cont [2/16] 0.0, 128
    %285 = vxpose.xlu0.b32.cont [3/16] 0.0, 128
    %286 = vxpose.xlu0.b32.cont [4/16] 0.0, 128
    %287 = vxpose.xlu0.b32.cont [5/16] 0.0, 128
    %288 = vxpose.xlu0.b32.cont [6/16] 0.0, 128
    %289 = vxpose.xlu0.b32.cont [7/16] 0.0, 128
    %290 = vxpose.xlu0.b32.cont [8/16] 0.0, 128
    %291 = vxpose.xlu0.b32.cont [9/16] 0.0, 128
    %292 = vxpose.xlu0.b32.cont [10/16] 0.0, 128
    %293 = vxpose.xlu0.b32.cont [11/16] 0.0, 128
    %294 = vxpose.xlu0.b32.cont [12/16] 0.0, 128
    %295 = vxpose.xlu0.b32.cont [13/16] 0.0, 128
    %296 = vxpose.xlu0.b32.cont [14/16] 0.0, 128
    %297 = vxpose.xlu0.b32.cont [15/16] 0.0, 128
    %298 = vxpose.xlu0.b32.end [16/16] 0.0, 128
    %v299 = vpop.trf.xlu0
    %v300 = vpop.trf.xlu0
    %v301 = vpop.trf.xlu0
    %v302 = vpop.trf.xlu0
    %v303 = vpop.trf.xlu0
    %v304 = vpop.trf.xlu0
    %v305 = vpop.trf.xlu0
    %v306 = vpop.trf.xlu0
    %v307 = vpop.trf.xlu0
    %v308 = vpop.trf.xlu0
    %v309 = vpop.trf.xlu0
    %v310 = vpop.trf.xlu0
    %v311 = vpop.trf.xlu0
    %v312 = vpop.trf.xlu0
    %v313 = vpop.trf.xlu0
    %v314 = vpop.trf.xlu0
    %vm315 = vcmask 64512
    %v317 = vsel %vm315, %v299, 0
    %v320 = vsel %vm315, %v300, 0
    %v323 = vsel %vm315, %v301, 0
    %v326 = vsel %vm315, %v302, 0
    %328 = vmatprep.subr.mxu0 0.0
    %329 = vmatpush1.msra.mxu0 0.0
    %330 = vmatprep.subr.mxu0 0.0
    %331 = vmatpush1.msra.mxu0 0.0
    %332 = vmatprep.subr.mxu0 0.0
    %333 = vmatpush1.msra.mxu0 0.0
    %334 = vmatprep.subr.mxu0 0.0
    %335 = vmatpush1.msra.mxu0 0.0
    %336 = vmatprep.subr.mxu0 0.0
    %337 = vmatpush1.msra.mxu0 0.0
    %338 = vmatprep.subr.mxu0 0.0
    %339 = vmatpush1.msra.mxu0 0.0
    %340 = vmatprep.subr.mxu0 0.0
    %341 = vmatpush1.msra.mxu0 0.0
    %342 = vmatprep.subr.mxu0 0.0
    %343 = vmatpush1.msra.mxu0 0.0
    %344 = vmatprep.subr.mxu0 0.0
    %345 = vmatpush1.msra.mxu0 0.0
    %346 = vmatprep.subr.mxu0 0.0
    %347 = vmatpush1.msra.mxu0 0.0
    %348 = vmatprep.subr.mxu0 0.0
    %349 = vmatpush1.msra.mxu0 0.0
    %350 = vmatprep.subr.mxu0 0.0
    %351 = vmatpush1.msra.mxu0 0.0
    %352 = vmatprep.subr.mxu0 0.0
    %353 = vmatpush1.msra.mxu0 0.0
    %354 = vmatprep.subr.mxu0 0.0
    %355 = vmatpush1.msra.mxu0 0.0
    %356 = vmatprep.subr.mxu0 0.0
    %357 = vmatpush1.msra.mxu0 0.0
    %358 = vmatprep.subr.mxu0 0.0
    %359 = vmatpush1.msra.mxu0 %v205
    %360 = vmatprep.subr.mxu0 0.0
    %361 = vmatpush2.msra.mxu0 0.0
    %362 = vmatprep.subr.mxu0 0.0
    %363 = vmatpush2.msra.mxu0 0.0
    %364 = vmatprep.subr.mxu0 0.0
    %365 = vmatpush2.msra.mxu0 0.0
    %366 = vmatprep.subr.mxu0 0.0
    %367 = vmatpush2.msra.mxu0 0.0
    %368 = vmatprep.subr.mxu0 0.0
    %369 = vmatpush2.msra.mxu0 0.0
    %370 = vmatprep.subr.mxu0 0.0
    %371 = vmatpush2.msra.mxu0 0.0
    %372 = vmatprep.subr.mxu0 0.0
    %373 = vmatpush2.msra.mxu0 0.0
    %374 = vmatprep.subr.mxu0 0.0
    %375 = vmatpush2.msra.mxu0 0.0
    %376 = vmatprep.subr.mxu0 0.0
    %377 = vmatpush2.msra.mxu0 0.0
    %378 = vmatprep.subr.mxu0 0.0
    %379 = vmatpush2.msra.mxu0 0.0
    %380 = vmatprep.subr.mxu0 0.0
    %381 = vmatpush2.msra.mxu0 0.0
    %382 = vmatprep.subr.mxu0 0.0
    %383 = vmatpush2.msra.mxu0 0.0
    %384 = vmatprep.subr.mxu0 0.0
    %385 = vmatpush2.msra.mxu0 0.0
    %386 = vmatprep.subr.mxu0 0.0
    %387 = vmatpush2.msra.mxu0 0.0
    %388 = vmatprep.subr.mxu0 0.0
    %389 = vmatpush2.msra.mxu0 0.0
    %390 = vmatprep.subr.mxu0 0.0
    %391 = vmatpush2.msra.mxu0 0.0
    %392 = vmatprep.mubr.f32.mxu0 0.0
    %393 = vmatmul.mubr.f32.gmra.mxu0 %v317
    %v394 = vpop.f32.mrf.mxu0
    %v395 = vadd.f32 0.0, %v394
    %v396 = vpop.f32.mrf.mxu0
    %397 = vmatprep.mubr.f32.mxu0 0.0
    %398 = vmatmul.mubr.f32.gmra.mxu0 %v320
    %v399 = vpop.f32.mrf.mxu0
    %v400 = vadd.f32 0.0, %v399
    %v401 = vpop.f32.mrf.mxu0
    %402 = vmatprep.mubr.f32.mxu0 0.0
    %403 = vmatmul.mubr.f32.gmra.mxu0 %v323
    %v404 = vpop.f32.mrf.mxu0
    %v405 = vadd.f32 0.0, %v404
    %v406 = vpop.f32.mrf.mxu0
    %407 = vmatprep.mubr.f32.mxu0 0.0
    %408 = vmatmul.mubr.f32.gmra.mxu0 %v326
    %v409 = vpop.f32.mrf.mxu0
    %v410 = vadd.f32 0.0, %v409
    %v411 = vpop.f32.mrf.mxu0
    %412 = vdwg.mxu0
    %413 = vxpose.xlu0.b32.start [1/16] %v210, 128
    %414 = vxpose.xlu0.b32.cont [2/16] 0.0, 128
    %415 = vxpose.xlu0.b32.cont [3/16] 0.0, 128
    %416 = vxpose.xlu0.b32.cont [4/16] 0.0, 128
    %417 = vxpose.xlu0.b32.cont [5/16] 0.0, 128
    %418 = vxpose.xlu0.b32.cont [6/16] 0.0, 128
    %419 = vxpose.xlu0.b32.cont [7/16] 0.0, 128
    %420 = vxpose.xlu0.b32.cont [8/16] 0.0, 128
    %421 = vxpose.xlu0.b32.cont [9/16] 0.0, 128
    %422 = vxpose.xlu0.b32.cont [10/16] 0.0, 128
    %423 = vxpose.xlu0.b32.cont [11/16] 0.0, 128
    %424 = vxpose.xlu0.b32.cont [12/16] 0.0, 128
    %425 = vxpose.xlu0.b32.cont [13/16] 0.0, 128
    %426 = vxpose.xlu0.b32.cont [14/16] 0.0, 128
    %427 = vxpose.xlu0.b32.cont [15/16] 0.0, 128
    %428 = vxpose.xlu0.b32.end [16/16] 0.0, 128
    %v429 = vpop.trf.xlu0
    %v430 = vpop.trf.xlu0
    %v431 = vpop.trf.xlu0
    %v432 = vpop.trf.xlu0
    %v433 = vpop.trf.xlu0
    %v434 = vpop.trf.xlu0
    %v435 = vpop.trf.xlu0
    %v436 = vpop.trf.xlu0
    %v437 = vpop.trf.xlu0
    %v438 = vpop.trf.xlu0
    %v439 = vpop.trf.xlu0
    %v440 = vpop.trf.xlu0
    %v441 = vpop.trf.xlu0
    %v442 = vpop.trf.xlu0
    %v443 = vpop.trf.xlu0
    %v444 = vpop.trf.xlu0
    %v446 = vsel %vm315, %v429, 0
    %v449 = vsel %vm315, %v430, 0
    %v452 = vsel %vm315, %v431, 0
    %v455 = vsel %vm315, %v432, 0
    %457 = vmatprep.subr.mxu0 0.0
    %458 = vmatpush1.msra.mxu0 0.0
    %459 = vmatprep.subr.mxu0 0.0
    %460 = vmatpush1.msra.mxu0 0.0
    %461 = vmatprep.subr.mxu0 0.0
    %462 = vmatpush1.msra.mxu0 0.0
    %463 = vmatprep.subr.mxu0 0.0
    %464 = vmatpush1.msra.mxu0 0.0
    %465 = vmatprep.subr.mxu0 0.0
    %466 = vmatpush1.msra.mxu0 0.0
    %467 = vmatprep.subr.mxu0 0.0
    %468 = vmatpush1.msra.mxu0 0.0
    %469 = vmatprep.subr.mxu0 0.0
    %470 = vmatpush1.msra.mxu0 0.0
    %471 = vmatprep.subr.mxu0 0.0
    %472 = vmatpush1.msra.mxu0 0.0
    %473 = vmatprep.subr.mxu0 0.0
    %474 = vmatpush1.msra.mxu0 0.0
    %475 = vmatprep.subr.mxu0 0.0
    %476 = vmatpush1.msra.mxu0 0.0
    %477 = vmatprep.subr.mxu0 0.0
    %478 = vmatpush1.msra.mxu0 0.0
    %479 = vmatprep.subr.mxu0 0.0
    %480 = vmatpush1.msra.mxu0 0.0
    %481 = vmatprep.subr.mxu0 0.0
    %482 = vmatpush1.msra.mxu0 0.0
    %483 = vmatprep.subr.mxu0 0.0
    %484 = vmatpush1.msra.mxu0 0.0
    %485 = vmatprep.subr.mxu0 0.0
    %486 = vmatpush1.msra.mxu0 0.0
    %487 = vmatprep.subr.mxu0 0.0
    %488 = vmatpush1.msra.mxu0 %v210
    %489 = vmatprep.subr.mxu0 0.0
    %490 = vmatpush2.msra.mxu0 0.0
    %491 = vmatprep.subr.mxu0 0.0
    %492 = vmatpush2.msra.mxu0 0.0
    %493 = vmatprep.subr.mxu0 0.0
    %494 = vmatpush2.msra.mxu0 0.0
    %495 = vmatprep.subr.mxu0 0.0
    %496 = vmatpush2.msra.mxu0 0.0
    %497 = vmatprep.subr.mxu0 0.0
    %498 = vmatpush2.msra.mxu0 0.0
    %499 = vmatprep.subr.mxu0 0.0
    %500 = vmatpush2.msra.mxu0 0.0
    %501 = vmatprep.subr.mxu0 0.0
    %502 = vmatpush2.msra.mxu0 0.0
    %503 = vmatprep.subr.mxu0 0.0
    %504 = vmatpush2.msra.mxu0 0.0
    %505 = vmatprep.subr.mxu0 0.0
    %506 = vmatpush2.msra.mxu0 0.0
    %507 = vmatprep.subr.mxu0 0.0
    %508 = vmatpush2.msra.mxu0 0.0
    %509 = vmatprep.subr.mxu0 0.0
    %510 = vmatpush2.msra.mxu0 0.0
    %511 = vmatprep.subr.mxu0 0.0
    %512 = vmatpush2.msra.mxu0 0.0
    %513 = vmatprep.subr.mxu0 0.0
    %514 = vmatpush2.msra.mxu0 0.0
    %515 = vmatprep.subr.mxu0 0.0
    %516 = vmatpush2.msra.mxu0 0.0
    %517 = vmatprep.subr.mxu0 0.0
    %518 = vmatpush2.msra.mxu0 0.0
    %519 = vmatprep.subr.mxu0 0.0
    %520 = vmatpush2.msra.mxu0 0.0
    %521 = vmatprep.mubr.f32.mxu0 0.0
    %522 = vmatmul.mubr.f32.gmra.mxu0 %v446
    %v523 = vpop.f32.mrf.mxu0
    %v524 = vadd.f32 0.0, %v523
    %v525 = vpop.f32.mrf.mxu0
    %526 = vmatprep.mubr.f32.mxu0 0.0
    %527 = vmatmul.mubr.f32.gmra.mxu0 %v449
    %v528 = vpop.f32.mrf.mxu0
    %v529 = vadd.f32 0.0, %v528
    %v530 = vpop.f32.mrf.mxu0
    %531 = vmatprep.mubr.f32.mxu0 0.0
    %532 = vmatmul.mubr.f32.gmra.mxu0 %v452
    %v533 = vpop.f32.mrf.mxu0
    %v534 = vadd.f32 0.0, %v533
    %v535 = vpop.f32.mrf.mxu0
    %536 = vmatprep.mubr.f32.mxu0 0.0
    %537 = vmatmul.mubr.f32.gmra.mxu0 %v455
    %v538 = vpop.f32.mrf.mxu0
    %v539 = vadd.f32 0.0, %v538
    %v540 = vpop.f32.mrf.mxu0
    %541 = vdwg.mxu0
    %542 = vxpose.xlu0.b32.start [1/16] %v215, 128
    %543 = vxpose.xlu0.b32.cont [2/16] 0.0, 128
    %544 = vxpose.xlu0.b32.cont [3/16] 0.0, 128
    %545 = vxpose.xlu0.b32.cont [4/16] 0.0, 128
    %546 = vxpose.xlu0.b32.cont [5/16] 0.0, 128
    %547 = vxpose.xlu0.b32.cont [6/16] 0.0, 128
    %548 = vxpose.xlu0.b32.cont [7/16] 0.0, 128
    %549 = vxpose.xlu0.b32.cont [8/16] 0.0, 128
    %550 = vxpose.xlu0.b32.cont [9/16] 0.0, 128
    %551 = vxpose.xlu0.b32.cont [10/16] 0.0, 128
    %552 = vxpose.xlu0.b32.cont [11/16] 0.0, 128
    %553 = vxpose.xlu0.b32.cont [12/16] 0.0, 128
    %554 = vxpose.xlu0.b32.cont [13/16] 0.0, 128
    %555 = vxpose.xlu0.b32.cont [14/16] 0.0, 128
    %556 = vxpose.xlu0.b32.cont [15/16] 0.0, 128
    %557 = vxpose.xlu0.b32.end [16/16] 0.0, 128
    %v558 = vpop.trf.xlu0
    %v559 = vpop.trf.xlu0
    %v560 = vpop.trf.xlu0
    %v561 = vpop.trf.xlu0
    %v562 = vpop.trf.xlu0
    %v563 = vpop.trf.xlu0
    %v564 = vpop.trf.xlu0
    %v565 = vpop.trf.xlu0
    %v566 = vpop.trf.xlu0
    %v567 = vpop.trf.xlu0
    %v568 = vpop.trf.xlu0
    %v569 = vpop.trf.xlu0
    %v570 = vpop.trf.xlu0
    %v571 = vpop.trf.xlu0
    %v572 = vpop.trf.xlu0
    %v573 = vpop.trf.xlu0
    %v575 = vsel %vm315, %v558, 0
    %v578 = vsel %vm315, %v559, 0
    %v581 = vsel %vm315, %v560, 0
    %v584 = vsel %vm315, %v561, 0
    %586 = vmatprep.subr.mxu0 0.0
    %587 = vmatpush1.msra.mxu0 0.0
    %588 = vmatprep.subr.mxu0 0.0
    %589 = vmatpush1.msra.mxu0 0.0
    %590 = vmatprep.subr.mxu0 0.0
    %591 = vmatpush1.msra.mxu0 0.0
    %592 = vmatprep.subr.mxu0 0.0
    %593 = vmatpush1.msra.mxu0 0.0
    %594 = vmatprep.subr.mxu0 0.0
    %595 = vmatpush1.msra.mxu0 0.0
    %596 = vmatprep.subr.mxu0 0.0
    %597 = vmatpush1.msra.mxu0 0.0
    %598 = vmatprep.subr.mxu0 0.0
    %599 = vmatpush1.msra.mxu0 0.0
    %600 = vmatprep.subr.mxu0 0.0
    %601 = vmatpush1.msra.mxu0 0.0
    %602 = vmatprep.subr.mxu0 0.0
    %603 = vmatpush1.msra.mxu0 0.0
    %604 = vmatprep.subr.mxu0 0.0
    %605 = vmatpush1.msra.mxu0 0.0
    %606 = vmatprep.subr.mxu0 0.0
    %607 = vmatpush1.msra.mxu0 0.0
    %608 = vmatprep.subr.mxu0 0.0
    %609 = vmatpush1.msra.mxu0 0.0
    %610 = vmatprep.subr.mxu0 0.0
    %611 = vmatpush1.msra.mxu0 0.0
    %612 = vmatprep.subr.mxu0 0.0
    %613 = vmatpush1.msra.mxu0 0.0
    %614 = vmatprep.subr.mxu0 0.0
    %615 = vmatpush1.msra.mxu0 0.0
    %616 = vmatprep.subr.mxu0 0.0
    %617 = vmatpush1.msra.mxu0 %v215
    %618 = vmatprep.subr.mxu0 0.0
    %619 = vmatpush2.msra.mxu0 0.0
    %620 = vmatprep.subr.mxu0 0.0
    %621 = vmatpush2.msra.mxu0 0.0
    %622 = vmatprep.subr.mxu0 0.0
    %623 = vmatpush2.msra.mxu0 0.0
    %624 = vmatprep.subr.mxu0 0.0
    %625 = vmatpush2.msra.mxu0 0.0
    %626 = vmatprep.subr.mxu0 0.0
    %627 = vmatpush2.msra.mxu0 0.0
    %628 = vmatprep.subr.mxu0 0.0
    %629 = vmatpush2.msra.mxu0 0.0
    %630 = vmatprep.subr.mxu0 0.0
    %631 = vmatpush2.msra.mxu0 0.0
    %632 = vmatprep.subr.mxu0 0.0
    %633 = vmatpush2.msra.mxu0 0.0
    %634 = vmatprep.subr.mxu0 0.0
    %635 = vmatpush2.msra.mxu0 0.0
    %636 = vmatprep.subr.mxu0 0.0
    %637 = vmatpush2.msra.mxu0 0.0
    %638 = vmatprep.subr.mxu0 0.0
    %639 = vmatpush2.msra.mxu0 0.0
    %640 = vmatprep.subr.mxu0 0.0
    %641 = vmatpush2.msra.mxu0 0.0
    %642 = vmatprep.subr.mxu0 0.0
    %643 = vmatpush2.msra.mxu0 0.0
    %644 = vmatprep.subr.mxu0 0.0
    %645 = vmatpush2.msra.mxu0 0.0
    %646 = vmatprep.subr.mxu0 0.0
    %647 = vmatpush2.msra.mxu0 0.0
    %648 = vmatprep.subr.mxu0 0.0
    %649 = vmatpush2.msra.mxu0 0.0
    %650 = vmatprep.mubr.f32.mxu0 0.0
    %651 = vmatmul.mubr.f32.gmra.mxu0 %v575
    %v652 = vpop.f32.mrf.mxu0
    %v653 = vadd.f32 0.0, %v652
    %v654 = vpop.f32.mrf.mxu0
    %655 = vmatprep.mubr.f32.mxu0 0.0
    %656 = vmatmul.mubr.f32.gmra.mxu0 %v578
    %v657 = vpop.f32.mrf.mxu0
    %v658 = vadd.f32 0.0, %v657
    %v659 = vpop.f32.mrf.mxu0
    %660 = vmatprep.mubr.f32.mxu0 0.0
    %661 = vmatmul.mubr.f32.gmra.mxu0 %v581
    %v662 = vpop.f32.mrf.mxu0
    %v663 = vadd.f32 0.0, %v662
    %v664 = vpop.f32.mrf.mxu0
    %665 = vmatprep.mubr.f32.mxu0 0.0
    %666 = vmatmul.mubr.f32.gmra.mxu0 %v584
    %v667 = vpop.f32.mrf.mxu0
    %v668 = vadd.f32 0.0, %v667
    %v669 = vpop.f32.mrf.mxu0
    %670 = vdwg.mxu0
    %671 = vxpose.xlu0.b32.start [1/16] %v220, 128
    %672 = vxpose.xlu0.b32.cont [2/16] 0.0, 128
    %673 = vxpose.xlu0.b32.cont [3/16] 0.0, 128
    %674 = vxpose.xlu0.b32.cont [4/16] 0.0, 128
    %675 = vxpose.xlu0.b32.cont [5/16] 0.0, 128
    %676 = vxpose.xlu0.b32.cont [6/16] 0.0, 128
    %677 = vxpose.xlu0.b32.cont [7/16] 0.0, 128
    %678 = vxpose.xlu0.b32.cont [8/16] 0.0, 128
    %679 = vxpose.xlu0.b32.cont [9/16] 0.0, 128
    %680 = vxpose.xlu0.b32.cont [10/16] 0.0, 128
    %681 = vxpose.xlu0.b32.cont [11/16] 0.0, 128
    %682 = vxpose.xlu0.b32.cont [12/16] 0.0, 128
    %683 = vxpose.xlu0.b32.cont [13/16] 0.0, 128
    %684 = vxpose.xlu0.b32.cont [14/16] 0.0, 128
    %685 = vxpose.xlu0.b32.cont [15/16] 0.0, 128
    %686 = vxpose.xlu0.b32.end [16/16] 0.0, 128
    %v687 = vpop.trf.xlu0
    %v688 = vpop.trf.xlu0
    %v689 = vpop.trf.xlu0
    %v690 = vpop.trf.xlu0
    %v691 = vpop.trf.xlu0
    %v692 = vpop.trf.xlu0
    %v693 = vpop.trf.xlu0
    %v694 = vpop.trf.xlu0
    %v695 = vpop.trf.xlu0
    %v696 = vpop.trf.xlu0
    %v697 = vpop.trf.xlu0
    %v698 = vpop.trf.xlu0
    %v699 = vpop.trf.xlu0
    %v700 = vpop.trf.xlu0
    %v701 = vpop.trf.xlu0
    %v702 = vpop.trf.xlu0
    %v704 = vsel %vm315, %v687, 0
    %v707 = vsel %vm315, %v688, 0
    %v710 = vsel %vm315, %v689, 0
    %v713 = vsel %vm315, %v690, 0
    %715 = vmatprep.subr.mxu0 0.0
    %716 = vmatpush1.msra.mxu0 0.0
    %717 = vmatprep.subr.mxu0 0.0
    %718 = vmatpush1.msra.mxu0 0.0
    %719 = vmatprep.subr.mxu0 0.0
    %720 = vmatpush1.msra.mxu0 0.0
    %721 = vmatprep.subr.mxu0 0.0
    %722 = vmatpush1.msra.mxu0 0.0
    %723 = vmatprep.subr.mxu0 0.0
    %724 = vmatpush1.msra.mxu0 0.0
    %725 = vmatprep.subr.mxu0 0.0
    %726 = vmatpush1.msra.mxu0 0.0
    %727 = vmatprep.subr.mxu0 0.0
    %728 = vmatpush1.msra.mxu0 0.0
    %729 = vmatprep.subr.mxu0 0.0
    %730 = vmatpush1.msra.mxu0 0.0
    %731 = vmatprep.subr.mxu0 0.0
    %732 = vmatpush1.msra.mxu0 0.0
    %733 = vmatprep.subr.mxu0 0.0
    %734 = vmatpush1.msra.mxu0 0.0
    %735 = vmatprep.subr.mxu0 0.0
    %736 = vmatpush1.msra.mxu0 0.0
    %737 = vmatprep.subr.mxu0 0.0
    %738 = vmatpush1.msra.mxu0 0.0
    %739 = vmatprep.subr.mxu0 0.0
    %740 = vmatpush1.msra.mxu0 0.0
    %741 = vmatprep.subr.mxu0 0.0
    %742 = vmatpush1.msra.mxu0 0.0
    %743 = vmatprep.subr.mxu0 0.0
    %744 = vmatpush1.msra.mxu0 0.0
    %745 = vmatprep.subr.mxu0 0.0
    %746 = vmatpush1.msra.mxu0 %v220
    %747 = vmatprep.subr.mxu0 0.0
    %748 = vmatpush2.msra.mxu0 0.0
    %749 = vmatprep.subr.mxu0 0.0
    %750 = vmatpush2.msra.mxu0 0.0
    %751 = vmatprep.subr.mxu0 0.0
    %752 = vmatpush2.msra.mxu0 0.0
    %753 = vmatprep.subr.mxu0 0.0
    %754 = vmatpush2.msra.mxu0 0.0
    %755 = vmatprep.subr.mxu0 0.0
    %756 = vmatpush2.msra.mxu0 0.0
    %757 = vmatprep.subr.mxu0 0.0
    %758 = vmatpush2.msra.mxu0 0.0
    %759 = vmatprep.subr.mxu0 0.0
    %760 = vmatpush2.msra.mxu0 0.0
    %761 = vmatprep.subr.mxu0 0.0
    %762 = vmatpush2.msra.mxu0 0.0
    %763 = vmatprep.subr.mxu0 0.0
    %764 = vmatpush2.msra.mxu0 0.0
    %765 = vmatprep.subr.mxu0 0.0
    %766 = vmatpush2.msra.mxu0 0.0
    %767 = vmatprep.subr.mxu0 0.0
    %768 = vmatpush2.msra.mxu0 0.0
    %769 = vmatprep.subr.mxu0 0.0
    %770 = vmatpush2.msra.mxu0 0.0
    %771 = vmatprep.subr.mxu0 0.0
    %772 = vmatpush2.msra.mxu0 0.0
    %773 = vmatprep.subr.mxu0 0.0
    %774 = vmatpush2.msra.mxu0 0.0
    %775 = vmatprep.subr.mxu0 0.0
    %776 = vmatpush2.msra.mxu0 0.0
    %777 = vmatprep.subr.mxu0 0.0
    %778 = vmatpush2.msra.mxu0 0.0
    %779 = vmatprep.mubr.f32.mxu0 0.0
    %780 = vmatmul.mubr.f32.gmra.mxu0 %v704
    %v781 = vpop.f32.mrf.mxu0
    %v782 = vadd.f32 0.0, %v781
    %v783 = vpop.f32.mrf.mxu0
    %784 = vmatprep.mubr.f32.mxu0 0.0
    %785 = vmatmul.mubr.f32.gmra.mxu0 %v707
    %v786 = vpop.f32.mrf.mxu0
    %v787 = vadd.f32 0.0, %v786
    %v788 = vpop.f32.mrf.mxu0
    %789 = vmatprep.mubr.f32.mxu0 0.0
    %790 = vmatmul.mubr.f32.gmra.mxu0 %v710
    %v791 = vpop.f32.mrf.mxu0
    %v792 = vadd.f32 0.0, %v791
    %v793 = vpop.f32.mrf.mxu0
    %794 = vmatprep.mubr.f32.mxu0 0.0
    %795 = vmatmul.mubr.f32.gmra.mxu0 %v713
    %v796 = vpop.f32.mrf.mxu0
    %v797 = vadd.f32 0.0, %v796
    %v798 = vpop.f32.mrf.mxu0
    %799 = vdwg.mxu0
    %800 = vxpose.xlu0.b32.start [1/16] %v225, 128
    %801 = vxpose.xlu0.b32.cont [2/16] 0.0, 128
    %802 = vxpose.xlu0.b32.cont [3/16] 0.0, 128
    %803 = vxpose.xlu0.b32.cont [4/16] 0.0, 128
    %804 = vxpose.xlu0.b32.cont [5/16] 0.0, 128
    %805 = vxpose.xlu0.b32.cont [6/16] 0.0, 128
    %806 = vxpose.xlu0.b32.cont [7/16] 0.0, 128
    %807 = vxpose.xlu0.b32.cont [8/16] 0.0, 128
    %808 = vxpose.xlu0.b32.cont [9/16] 0.0, 128
    %809 = vxpose.xlu0.b32.cont [10/16] 0.0, 128
    %810 = vxpose.xlu0.b32.cont [11/16] 0.0, 128
    %811 = vxpose.xlu0.b32.cont [12/16] 0.0, 128
    %812 = vxpose.xlu0.b32.cont [13/16] 0.0, 128
    %813 = vxpose.xlu0.b32.cont [14/16] 0.0, 128
    %814 = vxpose.xlu0.b32.cont [15/16] 0.0, 128
    %815 = vxpose.xlu0.b32.end [16/16] 0.0, 128
    %v816 = vpop.trf.xlu0
    %v817 = vpop.trf.xlu0
    %v818 = vpop.trf.xlu0
    %v819 = vpop.trf.xlu0
    %v820 = vpop.trf.xlu0
    %v821 = vpop.trf.xlu0
    %v822 = vpop.trf.xlu0
    %v823 = vpop.trf.xlu0
    %v824 = vpop.trf.xlu0
    %v825 = vpop.trf.xlu0
    %v826 = vpop.trf.xlu0
    %v827 = vpop.trf.xlu0
    %v828 = vpop.trf.xlu0
    %v829 = vpop.trf.xlu0
    %v830 = vpop.trf.xlu0
    %v831 = vpop.trf.xlu0
    %v833 = vsel %vm315, %v816, 0
    %v836 = vsel %vm315, %v817, 0
    %v839 = vsel %vm315, %v818, 0
    %v842 = vsel %vm315, %v819, 0
    %844 = vmatprep.subr.mxu0 0.0
    %845 = vmatpush1.msra.mxu0 0.0
    %846 = vmatprep.subr.mxu0 0.0
    %847 = vmatpush1.msra.mxu0 0.0
    %848 = vmatprep.subr.mxu0 0.0
    %849 = vmatpush1.msra.mxu0 0.0
    %850 = vmatprep.subr.mxu0 0.0
    %851 = vmatpush1.msra.mxu0 0.0
    %852 = vmatprep.subr.mxu0 0.0
    %853 = vmatpush1.msra.mxu0 0.0
    %854 = vmatprep.subr.mxu0 0.0
    %855 = vmatpush1.msra.mxu0 0.0
    %856 = vmatprep.subr.mxu0 0.0
    %857 = vmatpush1.msra.mxu0 0.0
    %858 = vmatprep.subr.mxu0 0.0
    %859 = vmatpush1.msra.mxu0 0.0
    %860 = vmatprep.subr.mxu0 0.0
    %861 = vmatpush1.msra.mxu0 0.0
    %862 = vmatprep.subr.mxu0 0.0
    %863 = vmatpush1.msra.mxu0 0.0
    %864 = vmatprep.subr.mxu0 0.0
    %865 = vmatpush1.msra.mxu0 0.0
    %866 = vmatprep.subr.mxu0 0.0
    %867 = vmatpush1.msra.mxu0 0.0
    %868 = vmatprep.subr.mxu0 0.0
    %869 = vmatpush1.msra.mxu0 0.0
    %870 = vmatprep.subr.mxu0 0.0
    %871 = vmatpush1.msra.mxu0 0.0
    %872 = vmatprep.subr.mxu0 0.0
    %873 = vmatpush1.msra.mxu0 0.0
    %874 = vmatprep.subr.mxu0 0.0
    %875 = vmatpush1.msra.mxu0 %v225
    %876 = vmatprep.subr.mxu0 0.0
    %877 = vmatpush2.msra.mxu0 0.0
    %878 = vmatprep.subr.mxu0 0.0
    %879 = vmatpush2.msra.mxu0 0.0
    %880 = vmatprep.subr.mxu0 0.0
    %881 = vmatpush2.msra.mxu0 0.0
    %882 = vmatprep.subr.mxu0 0.0
    %883 = vmatpush2.msra.mxu0 0.0
    %884 = vmatprep.subr.mxu0 0.0
    %885 = vmatpush2.msra.mxu0 0.0
    %886 = vmatprep.subr.mxu0 0.0
    %887 = vmatpush2.msra.mxu0 0.0
    %888 = vmatprep.subr.mxu0 0.0
    %889 = vmatpush2.msra.mxu0 0.0
    %890 = vmatprep.subr.mxu0 0.0
    %891 = vmatpush2.msra.mxu0 0.0
    %892 = vmatprep.subr.mxu0 0.0
    %893 = vmatpush2.msra.mxu0 0.0
    %894 = vmatprep.subr.mxu0 0.0
    %895 = vmatpush2.msra.mxu0 0.0
    %896 = vmatprep.subr.mxu0 0.0
    %897 = vmatpush2.msra.mxu0 0.0
    %898 = vmatprep.subr.mxu0 0.0
    %899 = vmatpush2.msra.mxu0 0.0
    %900 = vmatprep.subr.mxu0 0.0
    %901 = vmatpush2.msra.mxu0 0.0
    %902 = vmatprep.subr.mxu0 0.0
    %903 = vmatpush2.msra.mxu0 0.0
    %904 = vmatprep.subr.mxu0 0.0
    %905 = vmatpush2.msra.mxu0 0.0
    %906 = vmatprep.subr.mxu0 0.0
    %907 = vmatpush2.msra.mxu0 0.0
    %908 = vmatprep.mubr.f32.mxu0 0.0
    %909 = vmatmul.mubr.f32.gmra.mxu0 %v833
    %v910 = vpop.f32.mrf.mxu0
    %v911 = vadd.f32 0.0, %v910
    %v912 = vpop.f32.mrf.mxu0
    %913 = vmatprep.mubr.f32.mxu0 0.0
    %914 = vmatmul.mubr.f32.gmra.mxu0 %v836
    %v915 = vpop.f32.mrf.mxu0
    %v916 = vadd.f32 0.0, %v915
    %v917 = vpop.f32.mrf.mxu0
    %918 = vmatprep.mubr.f32.mxu0 0.0
    %919 = vmatmul.mubr.f32.gmra.mxu0 %v839
    %v920 = vpop.f32.mrf.mxu0
    %v921 = vadd.f32 0.0, %v920
    %v922 = vpop.f32.mrf.mxu0
    %923 = vmatprep.mubr.f32.mxu0 0.0
    %924 = vmatmul.mubr.f32.gmra.mxu0 %v842
    %v925 = vpop.f32.mrf.mxu0
    %v926 = vadd.f32 0.0, %v925
    %v927 = vpop.f32.mrf.mxu0
    %928 = vdwg.mxu0
    %929 = vxpose.xlu0.b32.start [1/16] %v230, 128
    %930 = vxpose.xlu0.b32.cont [2/16] 0.0, 128
    %931 = vxpose.xlu0.b32.cont [3/16] 0.0, 128
    %932 = vxpose.xlu0.b32.cont [4/16] 0.0, 128
    %933 = vxpose.xlu0.b32.cont [5/16] 0.0, 128
    %934 = vxpose.xlu0.b32.cont [6/16] 0.0, 128
    %935 = vxpose.xlu0.b32.cont [7/16] 0.0, 128
    %936 = vxpose.xlu0.b32.cont [8/16] 0.0, 128
    %937 = vxpose.xlu0.b32.cont [9/16] 0.0, 128
    %938 = vxpose.xlu0.b32.cont [10/16] 0.0, 128
    %939 = vxpose.xlu0.b32.cont [11/16] 0.0, 128
    %940 = vxpose.xlu0.b32.cont [12/16] 0.0, 128
    %941 = vxpose.xlu0.b32.cont [13/16] 0.0, 128
    %942 = vxpose.xlu0.b32.cont [14/16] 0.0, 128
    %943 = vxpose.xlu0.b32.cont [15/16] 0.0, 128
    %944 = vxpose.xlu0.b32.end [16/16] 0.0, 128
    %v945 = vpop.trf.xlu0
    %v946 = vpop.trf.xlu0
    %v947 = vpop.trf.xlu0
    %v948 = vpop.trf.xlu0
    %v949 = vpop.trf.xlu0
    %v950 = vpop.trf.xlu0
    %v951 = vpop.trf.xlu0
    %v952 = vpop.trf.xlu0
    %v953 = vpop.trf.xlu0
    %v954 = vpop.trf.xlu0
    %v955 = vpop.trf.xlu0
    %v956 = vpop.trf.xlu0
    %v957 = vpop.trf.xlu0
    %v958 = vpop.trf.xlu0
    %v959 = vpop.trf.xlu0
    %v960 = vpop.trf.xlu0
    %v962 = vsel %vm315, %v945, 0
    %v965 = vsel %vm315, %v946, 0
    %v968 = vsel %vm315, %v947, 0
    %v971 = vsel %vm315, %v948, 0
    %973 = vmatprep.subr.mxu0 0.0
    %974 = vmatpush1.msra.mxu0 0.0
    %975 = vmatprep.subr.mxu0 0.0
    %976 = vmatpush1.msra.mxu0 0.0
    %977 = vmatprep.subr.mxu0 0.0
    %978 = vmatpush1.msra.mxu0 0.0
    %979 = vmatprep.subr.mxu0 0.0
    %980 = vmatpush1.msra.mxu0 0.0
    %981 = vmatprep.subr.mxu0 0.0
    %982 = vmatpush1.msra.mxu0 0.0
    %983 = vmatprep.subr.mxu0 0.0
    %984 = vmatpush1.msra.mxu0 0.0
    %985 = vmatprep.subr.mxu0 0.0
    %986 = vmatpush1.msra.mxu0 0.0
    %987 = vmatprep.subr.mxu0 0.0
    %988 = vmatpush1.msra.mxu0 0.0
    %989 = vmatprep.subr.mxu0 0.0
    %990 = vmatpush1.msra.mxu0 0.0
    %991 = vmatprep.subr.mxu0 0.0
    %992 = vmatpush1.msra.mxu0 0.0
    %993 = vmatprep.subr.mxu0 0.0
    %994 = vmatpush1.msra.mxu0 0.0
    %995 = vmatprep.subr.mxu0 0.0
    %996 = vmatpush1.msra.mxu0 0.0
    %997 = vmatprep.subr.mxu0 0.0
    %998 = vmatpush1.msra.mxu0 0.0
    %999 = vmatprep.subr.mxu0 0.0
    %1000 = vmatpush1.msra.mxu0 0.0
    %1001 = vmatprep.subr.mxu0 0.0
    %1002 = vmatpush1.msra.mxu0 0.0
    %1003 = vmatprep.subr.mxu0 0.0
    %1004 = vmatpush1.msra.mxu0 %v230
    %1005 = vmatprep.subr.mxu0 0.0
    %1006 = vmatpush2.msra.mxu0 0.0
    %1007 = vmatprep.subr.mxu0 0.0
    %1008 = vmatpush2.msra.mxu0 0.0
    %1009 = vmatprep.subr.mxu0 0.0
    %1010 = vmatpush2.msra.mxu0 0.0
    %1011 = vmatprep.subr.mxu0 0.0
    %1012 = vmatpush2.msra.mxu0 0.0
    %1013 = vmatprep.subr.mxu0 0.0
    %1014 = vmatpush2.msra.mxu0 0.0
    %1015 = vmatprep.subr.mxu0 0.0
    %1016 = vmatpush2.msra.mxu0 0.0
    %1017 = vmatprep.subr.mxu0 0.0
    %1018 = vmatpush2.msra.mxu0 0.0
    %1019 = vmatprep.subr.mxu0 0.0
    %1020 = vmatpush2.msra.mxu0 0.0
    %1021 = vmatprep.subr.mxu0 0.0
    %1022 = vmatpush2.msra.mxu0 0.0
    %1023 = vmatprep.subr.mxu0 0.0
    %1024 = vmatpush2.msra.mxu0 0.0
    %1025 = vmatprep.subr.mxu0 0.0
    %1026 = vmatpush2.msra.mxu0 0.0
    %1027 = vmatprep.subr.mxu0 0.0
    %1028 = vmatpush2.msra.mxu0 0.0
    %1029 = vmatprep.subr.mxu0 0.0
    %1030 = vmatpush2.msra.mxu0 0.0
    %1031 = vmatprep.subr.mxu0 0.0
    %1032 = vmatpush2.msra.mxu0 0.0
    %1033 = vmatprep.subr.mxu0 0.0
    %1034 = vmatpush2.msra.mxu0 0.0
    %1035 = vmatprep.subr.mxu0 0.0
    %1036 = vmatpush2.msra.mxu0 0.0
    %1037 = vmatprep.mubr.f32.mxu0 0.0
    %1038 = vmatmul.mubr.f32.gmra.mxu0 %v962
    %v1039 = vpop.f32.mrf.mxu0
    %v1040 = vadd.f32 0.0, %v1039
    %v1041 = vpop.f32.mrf.mxu0
    %1042 = vmatprep.mubr.f32.mxu0 0.0
    %1043 = vmatmul.mubr.f32.gmra.mxu0 %v965
    %v1044 = vpop.f32.mrf.mxu0
    %v1045 = vadd.f32 0.0, %v1044
    %v1046 = vpop.f32.mrf.mxu0
    %1047 = vmatprep.mubr.f32.mxu0 0.0
    %1048 = vmatmul.mubr.f32.gmra.mxu0 %v968
    %v1049 = vpop.f32.mrf.mxu0
    %v1050 = vadd.f32 0.0, %v1049
    %v1051 = vpop.f32.mrf.mxu0
    %1052 = vmatprep.mubr.f32.mxu0 0.0
    %1053 = vmatmul.mubr.f32.gmra.mxu0 %v971
    %v1054 = vpop.f32.mrf.mxu0
    %v1055 = vadd.f32 0.0, %v1054
    %v1056 = vpop.f32.mrf.mxu0
    %1057 = vdwg.mxu0
    %1058 = vxpose.xlu0.b32.start [1/16] %v235, 128
    %1059 = vxpose.xlu0.b32.cont [2/16] 0.0, 128
    %1060 = vxpose.xlu0.b32.cont [3/16] 0.0, 128
    %1061 = vxpose.xlu0.b32.cont [4/16] 0.0, 128
    %1062 = vxpose.xlu0.b32.cont [5/16] 0.0, 128
    %1063 = vxpose.xlu0.b32.cont [6/16] 0.0, 128
    %1064 = vxpose.xlu0.b32.cont [7/16] 0.0, 128
    %1065 = vxpose.xlu0.b32.cont [8/16] 0.0, 128
    %1066 = vxpose.xlu0.b32.cont [9/16] 0.0, 128
    %1067 = vxpose.xlu0.b32.cont [10/16] 0.0, 128
    %1068 = vxpose.xlu0.b32.cont [11/16] 0.0, 128
    %1069 = vxpose.xlu0.b32.cont [12/16] 0.0, 128
    %1070 = vxpose.xlu0.b32.cont [13/16] 0.0, 128
    %1071 = vxpose.xlu0.b32.cont [14/16] 0.0, 128
    %1072 = vxpose.xlu0.b32.cont [15/16] 0.0, 128
    %1073 = vxpose.xlu0.b32.end [16/16] 0.0, 128
    %v1074 = vpop.trf.xlu0
    %v1075 = vpop.trf.xlu0
    %v1076 = vpop.trf.xlu0
    %v1077 = vpop.trf.xlu0
    %v1078 = vpop.trf.xlu0
    %v1079 = vpop.trf.xlu0
    %v1080 = vpop.trf.xlu0
    %v1081 = vpop.trf.xlu0
    %v1082 = vpop.trf.xlu0
    %v1083 = vpop.trf.xlu0
    %v1084 = vpop.trf.xlu0
    %v1085 = vpop.trf.xlu0
    %v1086 = vpop.trf.xlu0
    %v1087 = vpop.trf.xlu0
    %v1088 = vpop.trf.xlu0
    %v1089 = vpop.trf.xlu0
    %v1091 = vsel %vm315, %v1074, 0
    %v1094 = vsel %vm315, %v1075, 0
    %v1097 = vsel %vm315, %v1076, 0
    %v1100 = vsel %vm315, %v1077, 0
    %1102 = vmatprep.subr.mxu0 0.0
    %1103 = vmatpush1.msra.mxu0 0.0
    %1104 = vmatprep.subr.mxu0 0.0
    %1105 = vmatpush1.msra.mxu0 0.0
    %1106 = vmatprep.subr.mxu0 0.0
    %1107 = vmatpush1.msra.mxu0 0.0
    %1108 = vmatprep.subr.mxu0 0.0
    %1109 = vmatpush1.msra.mxu0 0.0
    %1110 = vmatprep.subr.mxu0 0.0
    %1111 = vmatpush1.msra.mxu0 0.0
    %1112 = vmatprep.subr.mxu0 0.0
    %1113 = vmatpush1.msra.mxu0 0.0
    %1114 = vmatprep.subr.mxu0 0.0
    %1115 = vmatpush1.msra.mxu0 0.0
    %1116 = vmatprep.subr.mxu0 0.0
    %1117 = vmatpush1.msra.mxu0 0.0
    %1118 = vmatprep.subr.mxu0 0.0
    %1119 = vmatpush1.msra.mxu0 0.0
    %1120 = vmatprep.subr.mxu0 0.0
    %1121 = vmatpush1.msra.mxu0 0.0
    %1122 = vmatprep.subr.mxu0 0.0
    %1123 = vmatpush1.msra.mxu0 0.0
    %1124 = vmatprep.subr.mxu0 0.0
    %1125 = vmatpush1.msra.mxu0 0.0
    %1126 = vmatprep.subr.mxu0 0.0
    %1127 = vmatpush1.msra.mxu0 0.0
    %1128 = vmatprep.subr.mxu0 0.0
    %1129 = vmatpush1.msra.mxu0 0.0
    %1130 = vmatprep.subr.mxu0 0.0
    %1131 = vmatpush1.msra.mxu0 0.0
    %1132 = vmatprep.subr.mxu0 0.0
    %1133 = vmatpush1.msra.mxu0 %v235
    %1134 = vmatprep.subr.mxu0 0.0
    %1135 = vmatpush2.msra.mxu0 0.0
    %1136 = vmatprep.subr.mxu0 0.0
    %1137 = vmatpush2.msra.mxu0 0.0
    %1138 = vmatprep.subr.mxu0 0.0
    %1139 = vmatpush2.msra.mxu0 0.0
    %1140 = vmatprep.subr.mxu0 0.0
    %1141 = vmatpush2.msra.mxu0 0.0
    %1142 = vmatprep.subr.mxu0 0.0
    %1143 = vmatpush2.msra.mxu0 0.0
    %1144 = vmatprep.subr.mxu0 0.0
    %1145 = vmatpush2.msra.mxu0 0.0
    %1146 = vmatprep.subr.mxu0 0.0
    %1147 = vmatpush2.msra.mxu0 0.0
    %1148 = vmatprep.subr.mxu0 0.0
    %1149 = vmatpush2.msra.mxu0 0.0
    %1150 = vmatprep.subr.mxu0 0.0
    %1151 = vmatpush2.msra.mxu0 0.0
    %1152 = vmatprep.subr.mxu0 0.0
    %1153 = vmatpush2.msra.mxu0 0.0
    %1154 = vmatprep.subr.mxu0 0.0
    %1155 = vmatpush2.msra.mxu0 0.0
    %1156 = vmatprep.subr.mxu0 0.0
    %1157 = vmatpush2.msra.mxu0 0.0
    %1158 = vmatprep.subr.mxu0 0.0
    %1159 = vmatpush2.msra.mxu0 0.0
    %1160 = vmatprep.subr.mxu0 0.0
    %1161 = vmatpush2.msra.mxu0 0.0
    %1162 = vmatprep.subr.mxu0 0.0
    %1163 = vmatpush2.msra.mxu0 0.0
    %1164 = vmatprep.subr.mxu0 0.0
    %1165 = vmatpush2.msra.mxu0 0.0
    %1166 = vmatprep.mubr.f32.mxu0 0.0
    %1167 = vmatmul.mubr.f32.gmra.mxu0 %v1091
    %v1168 = vpop.f32.mrf.mxu0
    %v1169 = vadd.f32 0.0, %v1168
    %v1170 = vpop.f32.mrf.mxu0
    %1171 = vmatprep.mubr.f32.mxu0 0.0
    %1172 = vmatmul.mubr.f32.gmra.mxu0 %v1094
    %v1173 = vpop.f32.mrf.mxu0
    %v1174 = vadd.f32 0.0, %v1173
    %v1175 = vpop.f32.mrf.mxu0
    %1176 = vmatprep.mubr.f32.mxu0 0.0
    %1177 = vmatmul.mubr.f32.gmra.mxu0 %v1097
    %v1178 = vpop.f32.mrf.mxu0
    %v1179 = vadd.f32 0.0, %v1178
    %v1180 = vpop.f32.mrf.mxu0
    %1181 = vmatprep.mubr.f32.mxu0 0.0
    %1182 = vmatmul.mubr.f32.gmra.mxu0 %v1100
    %v1183 = vpop.f32.mrf.mxu0
    %v1184 = vadd.f32 0.0, %v1183
    %v1185 = vpop.f32.mrf.mxu0
    %1186 = vdwg.mxu0
    %1187 = vxpose.xlu0.b32.start [1/16] %v240, 128
    %1188 = vxpose.xlu0.b32.cont [2/16] 0.0, 128
    %1189 = vxpose.xlu0.b32.cont [3/16] 0.0, 128
    %1190 = vxpose.xlu0.b32.cont [4/16] 0.0, 128
    %1191 = vxpose.xlu0.b32.cont [5/16] 0.0, 128
    %1192 = vxpose.xlu0.b32.cont [6/16] 0.0, 128
    %1193 = vxpose.xlu0.b32.cont [7/16] 0.0, 128
    %1194 = vxpose.xlu0.b32.cont [8/16] 0.0, 128
    %1195 = vxpose.xlu0.b32.cont [9/16] 0.0, 128
    %1196 = vxpose.xlu0.b32.cont [10/16] 0.0, 128
    %1197 = vxpose.xlu0.b32.cont [11/16] 0.0, 128
    %1198 = vxpose.xlu0.b32.cont [12/16] 0.0, 128
    %1199 = vxpose.xlu0.b32.cont [13/16] 0.0, 128
    %1200 = vxpose.xlu0.b32.cont [14/16] 0.0, 128
    %1201 = vxpose.xlu0.b32.cont [15/16] 0.0, 128
    %1202 = vxpose.xlu0.b32.end [16/16] 0.0, 128
    %v1203 = vpop.trf.xlu0
    %v1204 = vpop.trf.xlu0
    %v1205 = vpop.trf.xlu0
    %v1206 = vpop.trf.xlu0
    %v1207 = vpop.trf.xlu0
    %v1208 = vpop.trf.xlu0
    %v1209 = vpop.trf.xlu0
    %v1210 = vpop.trf.xlu0
    %v1211 = vpop.trf.xlu0
    %v1212 = vpop.trf.xlu0
    %v1213 = vpop.trf.xlu0
    %v1214 = vpop.trf.xlu0
    %v1215 = vpop.trf.xlu0
    %v1216 = vpop.trf.xlu0
    %v1217 = vpop.trf.xlu0
    %v1218 = vpop.trf.xlu0
    %v1220 = vsel %vm315, %v1203, 0
    %v1223 = vsel %vm315, %v1204, 0
    %v1226 = vsel %vm315, %v1205, 0
    %v1229 = vsel %vm315, %v1206, 0
    %1231 = vmatprep.subr.mxu0 0.0
    %1232 = vmatpush1.msra.mxu0 0.0
    %1233 = vmatprep.subr.mxu0 0.0
    %1234 = vmatpush1.msra.mxu0 0.0
    %1235 = vmatprep.subr.mxu0 0.0
    %1236 = vmatpush1.msra.mxu0 0.0
    %1237 = vmatprep.subr.mxu0 0.0
    %1238 = vmatpush1.msra.mxu0 0.0
    %1239 = vmatprep.subr.mxu0 0.0
    %1240 = vmatpush1.msra.mxu0 0.0
    %1241 = vmatprep.subr.mxu0 0.0
    %1242 = vmatpush1.msra.mxu0 0.0
    %1243 = vmatprep.subr.mxu0 0.0
    %1244 = vmatpush1.msra.mxu0 0.0
    %1245 = vmatprep.subr.mxu0 0.0
    %1246 = vmatpush1.msra.mxu0 0.0
    %1247 = vmatprep.subr.mxu0 0.0
    %1248 = vmatpush1.msra.mxu0 0.0
    %1249 = vmatprep.subr.mxu0 0.0
    %1250 = vmatpush1.msra.mxu0 0.0
    %1251 = vmatprep.subr.mxu0 0.0
    %1252 = vmatpush1.msra.mxu0 0.0
    %1253 = vmatprep.subr.mxu0 0.0
    %1254 = vmatpush1.msra.mxu0 0.0
    %1255 = vmatprep.subr.mxu0 0.0
    %1256 = vmatpush1.msra.mxu0 0.0
    %1257 = vmatprep.subr.mxu0 0.0
    %1258 = vmatpush1.msra.mxu0 0.0
    %1259 = vmatprep.subr.mxu0 0.0
    %1260 = vmatpush1.msra.mxu0 0.0
    %1261 = vmatprep.subr.mxu0 0.0
    %1262 = vmatpush1.msra.mxu0 %v240
    %1263 = vmatprep.subr.mxu0 0.0
    %1264 = vmatpush2.msra.mxu0 0.0
    %1265 = vmatprep.subr.mxu0 0.0
    %1266 = vmatpush2.msra.mxu0 0.0
    %1267 = vmatprep.subr.mxu0 0.0
    %1268 = vmatpush2.msra.mxu0 0.0
    %1269 = vmatprep.subr.mxu0 0.0
    %1270 = vmatpush2.msra.mxu0 0.0
    %1271 = vmatprep.subr.mxu0 0.0
    %1272 = vmatpush2.msra.mxu0 0.0
    %1273 = vmatprep.subr.mxu0 0.0
    %1274 = vmatpush2.msra.mxu0 0.0
    %1275 = vmatprep.subr.mxu0 0.0
    %1276 = vmatpush2.msra.mxu0 0.0
    %1277 = vmatprep.subr.mxu0 0.0
    %1278 = vmatpush2.msra.mxu0 0.0
    %1279 = vmatprep.subr.mxu0 0.0
    %1280 = vmatpush2.msra.mxu0 0.0
    %1281 = vmatprep.subr.mxu0 0.0
    %1282 = vmatpush2.msra.mxu0 0.0
    %1283 = vmatprep.subr.mxu0 0.0
    %1284 = vmatpush2.msra.mxu0 0.0
    %1285 = vmatprep.subr.mxu0 0.0
    %1286 = vmatpush2.msra.mxu0 0.0
    %1287 = vmatprep.subr.mxu0 0.0
    %1288 = vmatpush2.msra.mxu0 0.0
    %1289 = vmatprep.subr.mxu0 0.0
    %1290 = vmatpush2.msra.mxu0 0.0
    %1291 = vmatprep.subr.mxu0 0.0
    %1292 = vmatpush2.msra.mxu0 0.0
    %1293 = vmatprep.subr.mxu0 0.0
    %1294 = vmatpush2.msra.mxu0 0.0
    %1295 = vmatprep.mubr.f32.mxu0 0.0
    %1296 = vmatmul.mubr.f32.gmra.mxu0 %v1220
    %v1297 = vpop.f32.mrf.mxu0
    %v1298 = vadd.f32 0.0, %v1297
    %v1299 = vpop.f32.mrf.mxu0
    %1300 = vmatprep.mubr.f32.mxu0 0.0
    %1301 = vmatmul.mubr.f32.gmra.mxu0 %v1223
    %v1302 = vpop.f32.mrf.mxu0
    %v1303 = vadd.f32 0.0, %v1302
    %v1304 = vpop.f32.mrf.mxu0
    %1305 = vmatprep.mubr.f32.mxu0 0.0
    %1306 = vmatmul.mubr.f32.gmra.mxu0 %v1226
    %v1307 = vpop.f32.mrf.mxu0
    %v1308 = vadd.f32 0.0, %v1307
    %v1309 = vpop.f32.mrf.mxu0
    %1310 = vmatprep.mubr.f32.mxu0 0.0
    %1311 = vmatmul.mubr.f32.gmra.mxu0 %v1229
    %v1312 = vpop.f32.mrf.mxu0
    %v1313 = vadd.f32 0.0, %v1312
    %v1314 = vpop.f32.mrf.mxu0
    %1315 = vdwg.mxu0
    %1316 = vxpose.xlu0.b32.start [1/16] %v245, 128
    %1317 = vxpose.xlu0.b32.cont [2/16] 0.0, 128
    %1318 = vxpose.xlu0.b32.cont [3/16] 0.0, 128
    %1319 = vxpose.xlu0.b32.cont [4/16] 0.0, 128
    %1320 = vxpose.xlu0.b32.cont [5/16] 0.0, 128
    %1321 = vxpose.xlu0.b32.cont [6/16] 0.0, 128
    %1322 = vxpose.xlu0.b32.cont [7/16] 0.0, 128
    %1323 = vxpose.xlu0.b32.cont [8/16] 0.0, 128
    %1324 = vxpose.xlu0.b32.cont [9/16] 0.0, 128
    %1325 = vxpose.xlu0.b32.cont [10/16] 0.0, 128
    %1326 = vxpose.xlu0.b32.cont [11/16] 0.0, 128
    %1327 = vxpose.xlu0.b32.cont [12/16] 0.0, 128
    %1328 = vxpose.xlu0.b32.cont [13/16] 0.0, 128
    %1329 = vxpose.xlu0.b32.cont [14/16] 0.0, 128
    %1330 = vxpose.xlu0.b32.cont [15/16] 0.0, 128
    %1331 = vxpose.xlu0.b32.end [16/16] 0.0, 128
    %v1332 = vpop.trf.xlu0
    %v1333 = vpop.trf.xlu0
    %v1334 = vpop.trf.xlu0
    %v1335 = vpop.trf.xlu0
    %v1336 = vpop.trf.xlu0
    %v1337 = vpop.trf.xlu0
    %v1338 = vpop.trf.xlu0
    %v1339 = vpop.trf.xlu0
    %v1340 = vpop.trf.xlu0
    %v1341 = vpop.trf.xlu0
    %v1342 = vpop.trf.xlu0
    %v1343 = vpop.trf.xlu0
    %v1344 = vpop.trf.xlu0
    %v1345 = vpop.trf.xlu0
    %v1346 = vpop.trf.xlu0
    %v1347 = vpop.trf.xlu0
    %v1349 = vsel %vm315, %v1332, 0
    %v1352 = vsel %vm315, %v1333, 0
    %v1355 = vsel %vm315, %v1334, 0
    %v1358 = vsel %vm315, %v1335, 0
    %1360 = vmatprep.subr.mxu0 0.0
    %1361 = vmatpush1.msra.mxu0 0.0
    %1362 = vmatprep.subr.mxu0 0.0
    %1363 = vmatpush1.msra.mxu0 0.0
    %1364 = vmatprep.subr.mxu0 0.0
    %1365 = vmatpush1.msra.mxu0 0.0
    %1366 = vmatprep.subr.mxu0 0.0
    %1367 = vmatpush1.msra.mxu0 0.0
    %1368 = vmatprep.subr.mxu0 0.0
    %1369 = vmatpush1.msra.mxu0 0.0
    %1370 = vmatprep.subr.mxu0 0.0
    %1371 = vmatpush1.msra.mxu0 0.0
    %1372 = vmatprep.subr.mxu0 0.0
    %1373 = vmatpush1.msra.mxu0 0.0
    %1374 = vmatprep.subr.mxu0 0.0
    %1375 = vmatpush1.msra.mxu0 0.0
    %1376 = vmatprep.subr.mxu0 0.0
    %1377 = vmatpush1.msra.mxu0 0.0
    %1378 = vmatprep.subr.mxu0 0.0
    %1379 = vmatpush1.msra.mxu0 0.0
    %1380 = vmatprep.subr.mxu0 0.0
    %1381 = vmatpush1.msra.mxu0 0.0
    %1382 = vmatprep.subr.mxu0 0.0
    %1383 = vmatpush1.msra.mxu0 0.0
    %1384 = vmatprep.subr.mxu0 0.0
    %1385 = vmatpush1.msra.mxu0 0.0
    %1386 = vmatprep.subr.mxu0 0.0
    %1387 = vmatpush1.msra.mxu0 0.0
    %1388 = vmatprep.subr.mxu0 0.0
    %1389 = vmatpush1.msra.mxu0 0.0
    %1390 = vmatprep.subr.mxu0 0.0
    %1391 = vmatpush1.msra.mxu0 %v245
    %1392 = vmatprep.subr.mxu0 0.0
    %1393 = vmatpush2.msra.mxu0 0.0
    %1394 = vmatprep.subr.mxu0 0.0
    %1395 = vmatpush2.msra.mxu0 0.0
    %1396 = vmatprep.subr.mxu0 0.0
    %1397 = vmatpush2.msra.mxu0 0.0
    %1398 = vmatprep.subr.mxu0 0.0
    %1399 = vmatpush2.msra.mxu0 0.0
    %1400 = vmatprep.subr.mxu0 0.0
    %1401 = vmatpush2.msra.mxu0 0.0
    %1402 = vmatprep.subr.mxu0 0.0
    %1403 = vmatpush2.msra.mxu0 0.0
    %1404 = vmatprep.subr.mxu0 0.0
    %1405 = vmatpush2.msra.mxu0 0.0
    %1406 = vmatprep.subr.mxu0 0.0
    %1407 = vmatpush2.msra.mxu0 0.0
    %1408 = vmatprep.subr.mxu0 0.0
    %1409 = vmatpush2.msra.mxu0 0.0
    %1410 = vmatprep.subr.mxu0 0.0
    %1411 = vmatpush2.msra.mxu0 0.0
    %1412 = vmatprep.subr.mxu0 0.0
    %1413 = vmatpush2.msra.mxu0 0.0
    %1414 = vmatprep.subr.mxu0 0.0
    %1415 = vmatpush2.msra.mxu0 0.0
    %1416 = vmatprep.subr.mxu0 0.0
    %1417 = vmatpush2.msra.mxu0 0.0
    %1418 = vmatprep.subr.mxu0 0.0
    %1419 = vmatpush2.msra.mxu0 0.0
    %1420 = vmatprep.subr.mxu0 0.0
    %1421 = vmatpush2.msra.mxu0 0.0
    %1422 = vmatprep.subr.mxu0 0.0
    %1423 = vmatpush2.msra.mxu0 0.0
    %1424 = vmatprep.mubr.f32.mxu0 0.0
    %1425 = vmatmul.mubr.f32.gmra.mxu0 %v1349
    %v1426 = vpop.f32.mrf.mxu0
    %v1427 = vadd.f32 0.0, %v1426
    %v1428 = vpop.f32.mrf.mxu0
    %1429 = vmatprep.mubr.f32.mxu0 0.0
    %1430 = vmatmul.mubr.f32.gmra.mxu0 %v1352
    %v1431 = vpop.f32.mrf.mxu0
    %v1432 = vadd.f32 0.0, %v1431
    %v1433 = vpop.f32.mrf.mxu0
    %1434 = vmatprep.mubr.f32.mxu0 0.0
    %1435 = vmatmul.mubr.f32.gmra.mxu0 %v1355
    %v1436 = vpop.f32.mrf.mxu0
    %v1437 = vadd.f32 0.0, %v1436
    %v1438 = vpop.f32.mrf.mxu0
    %1439 = vmatprep.mubr.f32.mxu0 0.0
    %1440 = vmatmul.mubr.f32.gmra.mxu0 %v1358
    %v1441 = vpop.f32.mrf.mxu0
    %v1442 = vadd.f32 0.0, %v1441
    %v1443 = vpop.f32.mrf.mxu0
    %1444 = vdwg.mxu0
    %1445 = vxpose.xlu0.b32.start [1/16] %v250, 128
    %1446 = vxpose.xlu0.b32.cont [2/16] 0.0, 128
    %1447 = vxpose.xlu0.b32.cont [3/16] 0.0, 128
    %1448 = vxpose.xlu0.b32.cont [4/16] 0.0, 128
    %1449 = vxpose.xlu0.b32.cont [5/16] 0.0, 128
    %1450 = vxpose.xlu0.b32.cont [6/16] 0.0, 128
    %1451 = vxpose.xlu0.b32.cont [7/16] 0.0, 128
    %1452 = vxpose.xlu0.b32.cont [8/16] 0.0, 128
    %1453 = vxpose.xlu0.b32.cont [9/16] 0.0, 128
    %1454 = vxpose.xlu0.b32.cont [10/16] 0.0, 128
    %1455 = vxpose.xlu0.b32.cont [11/16] 0.0, 128
    %1456 = vxpose.xlu0.b32.cont [12/16] 0.0, 128
    %1457 = vxpose.xlu0.b32.cont [13/16] 0.0, 128
    %1458 = vxpose.xlu0.b32.cont [14/16] 0.0, 128
    %1459 = vxpose.xlu0.b32.cont [15/16] 0.0, 128
    %1460 = vxpose.xlu0.b32.end [16/16] 0.0, 128
    %v1461 = vpop.trf.xlu0
    %v1462 = vpop.trf.xlu0
    %v1463 = vpop.trf.xlu0
    %v1464 = vpop.trf.xlu0
    %v1465 = vpop.trf.xlu0
    %v1466 = vpop.trf.xlu0
    %v1467 = vpop.trf.xlu0
    %v1468 = vpop.trf.xlu0
    %v1469 = vpop.trf.xlu0
    %v1470 = vpop.trf.xlu0
    %v1471 = vpop.trf.xlu0
    %v1472 = vpop.trf.xlu0
    %v1473 = vpop.trf.xlu0
    %v1474 = vpop.trf.xlu0
    %v1475 = vpop.trf.xlu0
    %v1476 = vpop.trf.xlu0
    %v1478 = vsel %vm315, %v1461, 0
    %v1481 = vsel %vm315, %v1462, 0
    %v1484 = vsel %vm315, %v1463, 0
    %v1487 = vsel %vm315, %v1464, 0
    %1489 = vmatprep.subr.mxu0 0.0
    %1490 = vmatpush1.msra.mxu0 0.0
    %1491 = vmatprep.subr.mxu0 0.0
    %1492 = vmatpush1.msra.mxu0 0.0
    %1493 = vmatprep.subr.mxu0 0.0
    %1494 = vmatpush1.msra.mxu0 0.0
    %1495 = vmatprep.subr.mxu0 0.0
    %1496 = vmatpush1.msra.mxu0 0.0
    %1497 = vmatprep.subr.mxu0 0.0
    %1498 = vmatpush1.msra.mxu0 0.0
    %1499 = vmatprep.subr.mxu0 0.0
    %1500 = vmatpush1.msra.mxu0 0.0
    %1501 = vmatprep.subr.mxu0 0.0
    %1502 = vmatpush1.msra.mxu0 0.0
    %1503 = vmatprep.subr.mxu0 0.0
    %1504 = vmatpush1.msra.mxu0 0.0
    %1505 = vmatprep.subr.mxu0 0.0
    %1506 = vmatpush1.msra.mxu0 0.0
    %1507 = vmatprep.subr.mxu0 0.0
    %1508 = vmatpush1.msra.mxu0 0.0
    %1509 = vmatprep.subr.mxu0 0.0
    %1510 = vmatpush1.msra.mxu0 0.0
    %1511 = vmatprep.subr.mxu0 0.0
    %1512 = vmatpush1.msra.mxu0 0.0
    %1513 = vmatprep.subr.mxu0 0.0
    %1514 = vmatpush1.msra.mxu0 0.0
    %1515 = vmatprep.subr.mxu0 0.0
    %1516 = vmatpush1.msra.mxu0 0.0
    %1517 = vmatprep.subr.mxu0 0.0
    %1518 = vmatpush1.msra.mxu0 0.0
    %1519 = vmatprep.subr.mxu0 0.0
    %1520 = vmatpush1.msra.mxu0 %v250
    %1521 = vmatprep.subr.mxu0 0.0
    %1522 = vmatpush2.msra.mxu0 0.0
    %1523 = vmatprep.subr.mxu0 0.0
    %1524 = vmatpush2.msra.mxu0 0.0
    %1525 = vmatprep.subr.mxu0 0.0
    %1526 = vmatpush2.msra.mxu0 0.0
    %1527 = vmatprep.subr.mxu0 0.0
    %1528 = vmatpush2.msra.mxu0 0.0
    %1529 = vmatprep.subr.mxu0 0.0
    %1530 = vmatpush2.msra.mxu0 0.0
    %1531 = vmatprep.subr.mxu0 0.0
    %1532 = vmatpush2.msra.mxu0 0.0
    %1533 = vmatprep.subr.mxu0 0.0
    %1534 = vmatpush2.msra.mxu0 0.0
    %1535 = vmatprep.subr.mxu0 0.0
    %1536 = vmatpush2.msra.mxu0 0.0
    %1537 = vmatprep.subr.mxu0 0.0
    %1538 = vmatpush2.msra.mxu0 0.0
    %1539 = vmatprep.subr.mxu0 0.0
    %1540 = vmatpush2.msra.mxu0 0.0
    %1541 = vmatprep.subr.mxu0 0.0
    %1542 = vmatpush2.msra.mxu0 0.0
    %1543 = vmatprep.subr.mxu0 0.0
    %1544 = vmatpush2.msra.mxu0 0.0
    %1545 = vmatprep.subr.mxu0 0.0
    %1546 = vmatpush2.msra.mxu0 0.0
    %1547 = vmatprep.subr.mxu0 0.0
    %1548 = vmatpush2.msra.mxu0 0.0
    %1549 = vmatprep.subr.mxu0 0.0
    %1550 = vmatpush2.msra.mxu0 0.0
    %1551 = vmatprep.subr.mxu0 0.0
    %1552 = vmatpush2.msra.mxu0 0.0
    %1553 = vmatprep.mubr.f32.mxu0 0.0
    %1554 = vmatmul.mubr.f32.gmra.mxu0 %v1478
    %v1555 = vpop.f32.mrf.mxu0
    %v1556 = vadd.f32 0.0, %v1555
    %v1557 = vpop.f32.mrf.mxu0
    %1558 = vmatprep.mubr.f32.mxu0 0.0
    %1559 = vmatmul.mubr.f32.gmra.mxu0 %v1481
    %v1560 = vpop.f32.mrf.mxu0
    %v1561 = vadd.f32 0.0, %v1560
    %v1562 = vpop.f32.mrf.mxu0
    %1563 = vmatprep.mubr.f32.mxu0 0.0
    %1564 = vmatmul.mubr.f32.gmra.mxu0 %v1484
    %v1565 = vpop.f32.mrf.mxu0
    %v1566 = vadd.f32 0.0, %v1565
    %v1567 = vpop.f32.mrf.mxu0
    %1568 = vmatprep.mubr.f32.mxu0 0.0
    %1569 = vmatmul.mubr.f32.gmra.mxu0 %v1487
    %v1570 = vpop.f32.mrf.mxu0
    %v1571 = vadd.f32 0.0, %v1570
    %v1572 = vpop.f32.mrf.mxu0
    %1573 = vdwg.mxu0
    %1574 = vxpose.xlu0.b32.start [1/16] %v255, 128
    %1575 = vxpose.xlu0.b32.cont [2/16] 0.0, 128
    %1576 = vxpose.xlu0.b32.cont [3/16] 0.0, 128
    %1577 = vxpose.xlu0.b32.cont [4/16] 0.0, 128
    %1578 = vxpose.xlu0.b32.cont [5/16] 0.0, 128
    %1579 = vxpose.xlu0.b32.cont [6/16] 0.0, 128
    %1580 = vxpose.xlu0.b32.cont [7/16] 0.0, 128
    %1581 = vxpose.xlu0.b32.cont [8/16] 0.0, 128
    %1582 = vxpose.xlu0.b32.cont [9/16] 0.0, 128
    %1583 = vxpose.xlu0.b32.cont [10/16] 0.0, 128
    %1584 = vxpose.xlu0.b32.cont [11/16] 0.0, 128
    %1585 = vxpose.xlu0.b32.cont [12/16] 0.0, 128
    %1586 = vxpose.xlu0.b32.cont [13/16] 0.0, 128
    %1587 = vxpose.xlu0.b32.cont [14/16] 0.0, 128
    %1588 = vxpose.xlu0.b32.cont [15/16] 0.0, 128
    %1589 = vxpose.xlu0.b32.end [16/16] 0.0, 128
    %v1590 = vpop.trf.xlu0
    %v1591 = vpop.trf.xlu0
    %v1592 = vpop.trf.xlu0
    %v1593 = vpop.trf.xlu0
    %v1594 = vpop.trf.xlu0
    %v1595 = vpop.trf.xlu0
    %v1596 = vpop.trf.xlu0
    %v1597 = vpop.trf.xlu0
    %v1598 = vpop.trf.xlu0
    %v1599 = vpop.trf.xlu0
    %v1600 = vpop.trf.xlu0
    %v1601 = vpop.trf.xlu0
    %v1602 = vpop.trf.xlu0
    %v1603 = vpop.trf.xlu0
    %v1604 = vpop.trf.xlu0
    %v1605 = vpop.trf.xlu0
    %v1607 = vsel %vm315, %v1590, 0
    %v1610 = vsel %vm315, %v1591, 0
    %v1613 = vsel %vm315, %v1592, 0
    %v1616 = vsel %vm315, %v1593, 0
    %1618 = vmatprep.subr.mxu0 0.0
    %1619 = vmatpush1.msra.mxu0 0.0
    %1620 = vmatprep.subr.mxu0 0.0
    %1621 = vmatpush1.msra.mxu0 0.0
    %1622 = vmatprep.subr.mxu0 0.0
    %1623 = vmatpush1.msra.mxu0 0.0
    %1624 = vmatprep.subr.mxu0 0.0
    %1625 = vmatpush1.msra.mxu0 0.0
    %1626 = vmatprep.subr.mxu0 0.0
    %1627 = vmatpush1.msra.mxu0 0.0
    %1628 = vmatprep.subr.mxu0 0.0
    %1629 = vmatpush1.msra.mxu0 0.0
    %1630 = vmatprep.subr.mxu0 0.0
    %1631 = vmatpush1.msra.mxu0 0.0
    %1632 = vmatprep.subr.mxu0 0.0
    %1633 = vmatpush1.msra.mxu0 0.0
    %1634 = vmatprep.subr.mxu0 0.0
    %1635 = vmatpush1.msra.mxu0 0.0
    %1636 = vmatprep.subr.mxu0 0.0
    %1637 = vmatpush1.msra.mxu0 0.0
    %1638 = vmatprep.subr.mxu0 0.0
    %1639 = vmatpush1.msra.mxu0 0.0
    %1640 = vmatprep.subr.mxu0 0.0
    %1641 = vmatpush1.msra.mxu0 0.0
    %1642 = vmatprep.subr.mxu0 0.0
    %1643 = vmatpush1.msra.mxu0 0.0
    %1644 = vmatprep.subr.mxu0 0.0
    %1645 = vmatpush1.msra.mxu0 0.0
    %1646 = vmatprep.subr.mxu0 0.0
    %1647 = vmatpush1.msra.mxu0 0.0
    %1648 = vmatprep.subr.mxu0 0.0
    %1649 = vmatpush1.msra.mxu0 %v255
    %1650 = vmatprep.subr.mxu0 0.0
    %1651 = vmatpush2.msra.mxu0 0.0
    %1652 = vmatprep.subr.mxu0 0.0
    %1653 = vmatpush2.msra.mxu0 0.0
    %1654 = vmatprep.subr.mxu0 0.0
    %1655 = vmatpush2.msra.mxu0 0.0
    %1656 = vmatprep.subr.mxu0 0.0
    %1657 = vmatpush2.msra.mxu0 0.0
    %1658 = vmatprep.subr.mxu0 0.0
    %1659 = vmatpush2.msra.mxu0 0.0
    %1660 = vmatprep.subr.mxu0 0.0
    %1661 = vmatpush2.msra.mxu0 0.0
    %1662 = vmatprep.subr.mxu0 0.0
    %1663 = vmatpush2.msra.mxu0 0.0
    %1664 = vmatprep.subr.mxu0 0.0
    %1665 = vmatpush2.msra.mxu0 0.0
    %1666 = vmatprep.subr.mxu0 0.0
    %1667 = vmatpush2.msra.mxu0 0.0
    %1668 = vmatprep.subr.mxu0 0.0
    %1669 = vmatpush2.msra.mxu0 0.0
    %1670 = vmatprep.subr.mxu0 0.0
    %1671 = vmatpush2.msra.mxu0 0.0
    %1672 = vmatprep.subr.mxu0 0.0
    %1673 = vmatpush2.msra.mxu0 0.0
    %1674 = vmatprep.subr.mxu0 0.0
    %1675 = vmatpush2.msra.mxu0 0.0
    %1676 = vmatprep.subr.mxu0 0.0
    %1677 = vmatpush2.msra.mxu0 0.0
    %1678 = vmatprep.subr.mxu0 0.0
    %1679 = vmatpush2.msra.mxu0 0.0
    %1680 = vmatprep.subr.mxu0 0.0
    %1681 = vmatpush2.msra.mxu0 0.0
    %1682 = vmatprep.mubr.f32.mxu0 0.0
    %1683 = vmatmul.mubr.f32.gmra.mxu0 %v1607
    %v1684 = vpop.f32.mrf.mxu0
    %v1685 = vadd.f32 0.0, %v1684
    %v1686 = vpop.f32.mrf.mxu0
    %1687 = vmatprep.mubr.f32.mxu0 0.0
    %1688 = vmatmul.mubr.f32.gmra.mxu0 %v1610
    %v1689 = vpop.f32.mrf.mxu0
    %v1690 = vadd.f32 0.0, %v1689
    %v1691 = vpop.f32.mrf.mxu0
    %1692 = vmatprep.mubr.f32.mxu0 0.0
    %1693 = vmatmul.mubr.f32.gmra.mxu0 %v1613
    %v1694 = vpop.f32.mrf.mxu0
    %v1695 = vadd.f32 0.0, %v1694
    %v1696 = vpop.f32.mrf.mxu0
    %1697 = vmatprep.mubr.f32.mxu0 0.0
    %1698 = vmatmul.mubr.f32.gmra.mxu0 %v1616
    %v1699 = vpop.f32.mrf.mxu0
    %v1700 = vadd.f32 0.0, %v1699
    %v1701 = vpop.f32.mrf.mxu0
    %1702 = vdwg.mxu0
    %1703 = vxpose.xlu0.b32.start [1/16] %v260, 128
    %1704 = vxpose.xlu0.b32.cont [2/16] 0.0, 128
    %1705 = vxpose.xlu0.b32.cont [3/16] 0.0, 128
    %1706 = vxpose.xlu0.b32.cont [4/16] 0.0, 128
    %1707 = vxpose.xlu0.b32.cont [5/16] 0.0, 128
    %1708 = vxpose.xlu0.b32.cont [6/16] 0.0, 128
    %1709 = vxpose.xlu0.b32.cont [7/16] 0.0, 128
    %1710 = vxpose.xlu0.b32.cont [8/16] 0.0, 128
    %1711 = vxpose.xlu0.b32.cont [9/16] 0.0, 128
    %1712 = vxpose.xlu0.b32.cont [10/16] 0.0, 128
    %1713 = vxpose.xlu0.b32.cont [11/16] 0.0, 128
    %1714 = vxpose.xlu0.b32.cont [12/16] 0.0, 128
    %1715 = vxpose.xlu0.b32.cont [13/16] 0.0, 128
    %1716 = vxpose.xlu0.b32.cont [14/16] 0.0, 128
    %1717 = vxpose.xlu0.b32.cont [15/16] 0.0, 128
    %1718 = vxpose.xlu0.b32.end [16/16] 0.0, 128
    %v1719 = vpop.trf.xlu0
    %v1720 = vpop.trf.xlu0
    %v1721 = vpop.trf.xlu0
    %v1722 = vpop.trf.xlu0
    %v1723 = vpop.trf.xlu0
    %v1724 = vpop.trf.xlu0
    %v1725 = vpop.trf.xlu0
    %v1726 = vpop.trf.xlu0
    %v1727 = vpop.trf.xlu0
    %v1728 = vpop.trf.xlu0
    %v1729 = vpop.trf.xlu0
    %v1730 = vpop.trf.xlu0
    %v1731 = vpop.trf.xlu0
    %v1732 = vpop.trf.xlu0
    %v1733 = vpop.trf.xlu0
    %v1734 = vpop.trf.xlu0
    %v1736 = vsel %vm315, %v1719, 0
    %v1739 = vsel %vm315, %v1720, 0
    %v1742 = vsel %vm315, %v1721, 0
    %v1745 = vsel %vm315, %v1722, 0
    %1747 = vmatprep.subr.mxu0 0.0
    %1748 = vmatpush1.msra.mxu0 0.0
    %1749 = vmatprep.subr.mxu0 0.0
    %1750 = vmatpush1.msra.mxu0 0.0
    %1751 = vmatprep.subr.mxu0 0.0
    %1752 = vmatpush1.msra.mxu0 0.0
    %1753 = vmatprep.subr.mxu0 0.0
    %1754 = vmatpush1.msra.mxu0 0.0
    %1755 = vmatprep.subr.mxu0 0.0
    %1756 = vmatpush1.msra.mxu0 0.0
    %1757 = vmatprep.subr.mxu0 0.0
    %1758 = vmatpush1.msra.mxu0 0.0
    %1759 = vmatprep.subr.mxu0 0.0
    %1760 = vmatpush1.msra.mxu0 0.0
    %1761 = vmatprep.subr.mxu0 0.0
    %1762 = vmatpush1.msra.mxu0 0.0
    %1763 = vmatprep.subr.mxu0 0.0
    %1764 = vmatpush1.msra.mxu0 0.0
    %1765 = vmatprep.subr.mxu0 0.0
    %1766 = vmatpush1.msra.mxu0 0.0
    %1767 = vmatprep.subr.mxu0 0.0
    %1768 = vmatpush1.msra.mxu0 0.0
    %1769 = vmatprep.subr.mxu0 0.0
    %1770 = vmatpush1.msra.mxu0 0.0
    %1771 = vmatprep.subr.mxu0 0.0
    %1772 = vmatpush1.msra.mxu0 0.0
    %1773 = vmatprep.subr.mxu0 0.0
    %1774 = vmatpush1.msra.mxu0 0.0
    %1775 = vmatprep.subr.mxu0 0.0
    %1776 = vmatpush1.msra.mxu0 0.0
    %1777 = vmatprep.subr.mxu0 0.0
    %1778 = vmatpush1.msra.mxu0 %v260
    %1779 = vmatprep.subr.mxu0 0.0
    %1780 = vmatpush2.msra.mxu0 0.0
    %1781 = vmatprep.subr.mxu0 0.0
    %1782 = vmatpush2.msra.mxu0 0.0
    %1783 = vmatprep.subr.mxu0 0.0
    %1784 = vmatpush2.msra.mxu0 0.0
    %1785 = vmatprep.subr.mxu0 0.0
    %1786 = vmatpush2.msra.mxu0 0.0
    %1787 = vmatprep.subr.mxu0 0.0
    %1788 = vmatpush2.msra.mxu0 0.0
    %1789 = vmatprep.subr.mxu0 0.0
    %1790 = vmatpush2.msra.mxu0 0.0
    %1791 = vmatprep.subr.mxu0 0.0
    %1792 = vmatpush2.msra.mxu0 0.0
    %1793 = vmatprep.subr.mxu0 0.0
    %1794 = vmatpush2.msra.mxu0 0.0
    %1795 = vmatprep.subr.mxu0 0.0
    %1796 = vmatpush2.msra.mxu0 0.0
    %1797 = vmatprep.subr.mxu0 0.0
    %1798 = vmatpush2.msra.mxu0 0.0
    %1799 = vmatprep.subr.mxu0 0.0
    %1800 = vmatpush2.msra.mxu0 0.0
    %1801 = vmatprep.subr.mxu0 0.0
    %1802 = vmatpush2.msra.mxu0 0.0
    %1803 = vmatprep.subr.mxu0 0.0
    %1804 = vmatpush2.msra.mxu0 0.0
    %1805 = vmatprep.subr.mxu0 0.0
    %1806 = vmatpush2.msra.mxu0 0.0
    %1807 = vmatprep.subr.mxu0 0.0
    %1808 = vmatpush2.msra.mxu0 0.0
    %1809 = vmatprep.subr.mxu0 0.0
    %1810 = vmatpush2.msra.mxu0 0.0
    %1811 = vmatprep.mubr.f32.mxu0 0.0
    %1812 = vmatmul.mubr.f32.gmra.mxu0 %v1736
    %v1813 = vpop.f32.mrf.mxu0
    %v1814 = vadd.f32 0.0, %v1813
    %v1815 = vpop.f32.mrf.mxu0
    %1816 = vmatprep.mubr.f32.mxu0 0.0
    %1817 = vmatmul.mubr.f32.gmra.mxu0 %v1739
    %v1818 = vpop.f32.mrf.mxu0
    %v1819 = vadd.f32 0.0, %v1818
    %v1820 = vpop.f32.mrf.mxu0
    %1821 = vmatprep.mubr.f32.mxu0 0.0
    %1822 = vmatmul.mubr.f32.gmra.mxu0 %v1742
    %v1823 = vpop.f32.mrf.mxu0
    %v1824 = vadd.f32 0.0, %v1823
    %v1825 = vpop.f32.mrf.mxu0
    %1826 = vmatprep.mubr.f32.mxu0 0.0
    %1827 = vmatmul.mubr.f32.gmra.mxu0 %v1745
    %v1828 = vpop.f32.mrf.mxu0
    %v1829 = vadd.f32 0.0, %v1828
    %v1830 = vpop.f32.mrf.mxu0
    %1831 = vdwg.mxu0
    %1832 = vxpose.xlu0.b32.start [1/16] %v265, 128
    %1833 = vxpose.xlu0.b32.cont [2/16] 0.0, 128
    %1834 = vxpose.xlu0.b32.cont [3/16] 0.0, 128
    %1835 = vxpose.xlu0.b32.cont [4/16] 0.0, 128
    %1836 = vxpose.xlu0.b32.cont [5/16] 0.0, 128
    %1837 = vxpose.xlu0.b32.cont [6/16] 0.0, 128
    %1838 = vxpose.xlu0.b32.cont [7/16] 0.0, 128
    %1839 = vxpose.xlu0.b32.cont [8/16] 0.0, 128
    %1840 = vxpose.xlu0.b32.cont [9/16] 0.0, 128
    %1841 = vxpose.xlu0.b32.cont [10/16] 0.0, 128
    %1842 = vxpose.xlu0.b32.cont [11/16] 0.0, 128
    %1843 = vxpose.xlu0.b32.cont [12/16] 0.0, 128
    %1844 = vxpose.xlu0.b32.cont [13/16] 0.0, 128
    %1845 = vxpose.xlu0.b32.cont [14/16] 0.0, 128
    %1846 = vxpose.xlu0.b32.cont [15/16] 0.0, 128
    %1847 = vxpose.xlu0.b32.end [16/16] 0.0, 128
    %v1848 = vpop.trf.xlu0
    %v1849 = vpop.trf.xlu0
    %v1850 = vpop.trf.xlu0
    %v1851 = vpop.trf.xlu0
    %v1852 = vpop.trf.xlu0
    %v1853 = vpop.trf.xlu0
    %v1854 = vpop.trf.xlu0
    %v1855 = vpop.trf.xlu0
    %v1856 = vpop.trf.xlu0
    %v1857 = vpop.trf.xlu0
    %v1858 = vpop.trf.xlu0
    %v1859 = vpop.trf.xlu0
    %v1860 = vpop.trf.xlu0
    %v1861 = vpop.trf.xlu0
    %v1862 = vpop.trf.xlu0
    %v1863 = vpop.trf.xlu0
    %v1865 = vsel %vm315, %v1848, 0
    %v1868 = vsel %vm315, %v1849, 0
    %v1871 = vsel %vm315, %v1850, 0
    %v1874 = vsel %vm315, %v1851, 0
    %1876 = vmatprep.subr.mxu0 0.0
    %1877 = vmatpush1.msra.mxu0 0.0
    %1878 = vmatprep.subr.mxu0 0.0
    %1879 = vmatpush1.msra.mxu0 0.0
    %1880 = vmatprep.subr.mxu0 0.0
    %1881 = vmatpush1.msra.mxu0 0.0
    %1882 = vmatprep.subr.mxu0 0.0
    %1883 = vmatpush1.msra.mxu0 0.0
    %1884 = vmatprep.subr.mxu0 0.0
    %1885 = vmatpush1.msra.mxu0 0.0
    %1886 = vmatprep.subr.mxu0 0.0
    %1887 = vmatpush1.msra.mxu0 0.0
    %1888 = vmatprep.subr.mxu0 0.0
    %1889 = vmatpush1.msra.mxu0 0.0
    %1890 = vmatprep.subr.mxu0 0.0
    %1891 = vmatpush1.msra.mxu0 0.0
    %1892 = vmatprep.subr.mxu0 0.0
    %1893 = vmatpush1.msra.mxu0 0.0
    %1894 = vmatprep.subr.mxu0 0.0
    %1895 = vmatpush1.msra.mxu0 0.0
    %1896 = vmatprep.subr.mxu0 0.0
    %1897 = vmatpush1.msra.mxu0 0.0
    %1898 = vmatprep.subr.mxu0 0.0
    %1899 = vmatpush1.msra.mxu0 0.0
    %1900 = vmatprep.subr.mxu0 0.0
    %1901 = vmatpush1.msra.mxu0 0.0
    %1902 = vmatprep.subr.mxu0 0.0
    %1903 = vmatpush1.msra.mxu0 0.0
    %1904 = vmatprep.subr.mxu0 0.0
    %1905 = vmatpush1.msra.mxu0 0.0
    %1906 = vmatprep.subr.mxu0 0.0
    %1907 = vmatpush1.msra.mxu0 %v265
    %1908 = vmatprep.subr.mxu0 0.0
    %1909 = vmatpush2.msra.mxu0 0.0
    %1910 = vmatprep.subr.mxu0 0.0
    %1911 = vmatpush2.msra.mxu0 0.0
    %1912 = vmatprep.subr.mxu0 0.0
    %1913 = vmatpush2.msra.mxu0 0.0
    %1914 = vmatprep.subr.mxu0 0.0
    %1915 = vmatpush2.msra.mxu0 0.0
    %1916 = vmatprep.subr.mxu0 0.0
    %1917 = vmatpush2.msra.mxu0 0.0
    %1918 = vmatprep.subr.mxu0 0.0
    %1919 = vmatpush2.msra.mxu0 0.0
    %1920 = vmatprep.subr.mxu0 0.0
    %1921 = vmatpush2.msra.mxu0 0.0
    %1922 = vmatprep.subr.mxu0 0.0
    %1923 = vmatpush2.msra.mxu0 0.0
    %1924 = vmatprep.subr.mxu0 0.0
    %1925 = vmatpush2.msra.mxu0 0.0
    %1926 = vmatprep.subr.mxu0 0.0
    %1927 = vmatpush2.msra.mxu0 0.0
    %1928 = vmatprep.subr.mxu0 0.0
    %1929 = vmatpush2.msra.mxu0 0.0
    %1930 = vmatprep.subr.mxu0 0.0
    %1931 = vmatpush2.msra.mxu0 0.0
    %1932 = vmatprep.subr.mxu0 0.0
    %1933 = vmatpush2.msra.mxu0 0.0
    %1934 = vmatprep.subr.mxu0 0.0
    %1935 = vmatpush2.msra.mxu0 0.0
    %1936 = vmatprep.subr.mxu0 0.0
    %1937 = vmatpush2.msra.mxu0 0.0
    %1938 = vmatprep.subr.mxu0 0.0
    %1939 = vmatpush2.msra.mxu0 0.0
    %1940 = vmatprep.mubr.f32.mxu0 0.0
    %1941 = vmatmul.mubr.f32.gmra.mxu0 %v1865
    %v1942 = vpop.f32.mrf.mxu0
    %v1943 = vadd.f32 0.0, %v1942
    %v1944 = vpop.f32.mrf.mxu0
    %1945 = vmatprep.mubr.f32.mxu0 0.0
    %1946 = vmatmul.mubr.f32.gmra.mxu0 %v1868
    %v1947 = vpop.f32.mrf.mxu0
    %v1948 = vadd.f32 0.0, %v1947
    %v1949 = vpop.f32.mrf.mxu0
    %1950 = vmatprep.mubr.f32.mxu0 0.0
    %1951 = vmatmul.mubr.f32.gmra.mxu0 %v1871
    %v1952 = vpop.f32.mrf.mxu0
    %v1953 = vadd.f32 0.0, %v1952
    %v1954 = vpop.f32.mrf.mxu0
    %1955 = vmatprep.mubr.f32.mxu0 0.0
    %1956 = vmatmul.mubr.f32.gmra.mxu0 %v1874
    %v1957 = vpop.f32.mrf.mxu0
    %v1958 = vadd.f32 0.0, %v1957
    %v1959 = vpop.f32.mrf.mxu0
    %1960 = vdwg.mxu0
    %1961 = vxpose.xlu0.b32.start [1/16] %v270, 128
    %1962 = vxpose.xlu0.b32.cont [2/16] 0.0, 128
    %1963 = vxpose.xlu0.b32.cont [3/16] 0.0, 128
    %1964 = vxpose.xlu0.b32.cont [4/16] 0.0, 128
    %1965 = vxpose.xlu0.b32.cont [5/16] 0.0, 128
    %1966 = vxpose.xlu0.b32.cont [6/16] 0.0, 128
    %1967 = vxpose.xlu0.b32.cont [7/16] 0.0, 128
    %1968 = vxpose.xlu0.b32.cont [8/16] 0.0, 128
    %1969 = vxpose.xlu0.b32.cont [9/16] 0.0, 128
    %1970 = vxpose.xlu0.b32.cont [10/16] 0.0, 128
    %1971 = vxpose.xlu0.b32.cont [11/16] 0.0, 128
    %1972 = vxpose.xlu0.b32.cont [12/16] 0.0, 128
    %1973 = vxpose.xlu0.b32.cont [13/16] 0.0, 128
    %1974 = vxpose.xlu0.b32.cont [14/16] 0.0, 128
    %1975 = vxpose.xlu0.b32.cont [15/16] 0.0, 128
    %1976 = vxpose.xlu0.b32.end [16/16] 0.0, 128
    %v1977 = vpop.trf.xlu0
    %v1978 = vpop.trf.xlu0
    %v1979 = vpop.trf.xlu0
    %v1980 = vpop.trf.xlu0
    %v1981 = vpop.trf.xlu0
    %v1982 = vpop.trf.xlu0
    %v1983 = vpop.trf.xlu0
    %v1984 = vpop.trf.xlu0
    %v1985 = vpop.trf.xlu0
    %v1986 = vpop.trf.xlu0
    %v1987 = vpop.trf.xlu0
    %v1988 = vpop.trf.xlu0
    %v1989 = vpop.trf.xlu0
    %v1990 = vpop.trf.xlu0
    %v1991 = vpop.trf.xlu0
    %v1992 = vpop.trf.xlu0
    %v1994 = vsel %vm315, %v1977, 0
    %v1997 = vsel %vm315, %v1978, 0
    %v2000 = vsel %vm315, %v1979, 0
    %v2003 = vsel %vm315, %v1980, 0
    %2005 = vmatprep.subr.mxu0 0.0
    %2006 = vmatpush1.msra.mxu0 0.0
    %2007 = vmatprep.subr.mxu0 0.0
    %2008 = vmatpush1.msra.mxu0 0.0
    %2009 = vmatprep.subr.mxu0 0.0
    %2010 = vmatpush1.msra.mxu0 0.0
    %2011 = vmatprep.subr.mxu0 0.0
    %2012 = vmatpush1.msra.mxu0 0.0
    %2013 = vmatprep.subr.mxu0 0.0
    %2014 = vmatpush1.msra.mxu0 0.0
    %2015 = vmatprep.subr.mxu0 0.0
    %2016 = vmatpush1.msra.mxu0 0.0
    %2017 = vmatprep.subr.mxu0 0.0
    %2018 = vmatpush1.msra.mxu0 0.0
    %2019 = vmatprep.subr.mxu0 0.0
    %2020 = vmatpush1.msra.mxu0 0.0
    %2021 = vmatprep.subr.mxu0 0.0
    %2022 = vmatpush1.msra.mxu0 0.0
    %2023 = vmatprep.subr.mxu0 0.0
    %2024 = vmatpush1.msra.mxu0 0.0
    %2025 = vmatprep.subr.mxu0 0.0
    %2026 = vmatpush1.msra.mxu0 0.0
    %2027 = vmatprep.subr.mxu0 0.0
    %2028 = vmatpush1.msra.mxu0 0.0
    %2029 = vmatprep.subr.mxu0 0.0
    %2030 = vmatpush1.msra.mxu0 0.0
    %2031 = vmatprep.subr.mxu0 0.0
    %2032 = vmatpush1.msra.mxu0 0.0
    %2033 = vmatprep.subr.mxu0 0.0
    %2034 = vmatpush1.msra.mxu0 0.0
    %2035 = vmatprep.subr.mxu0 0.0
    %2036 = vmatpush1.msra.mxu0 %v270
    %2037 = vmatprep.subr.mxu0 0.0
    %2038 = vmatpush2.msra.mxu0 0.0
    %2039 = vmatprep.subr.mxu0 0.0
    %2040 = vmatpush2.msra.mxu0 0.0
    %2041 = vmatprep.subr.mxu0 0.0
    %2042 = vmatpush2.msra.mxu0 0.0
    %2043 = vmatprep.subr.mxu0 0.0
    %2044 = vmatpush2.msra.mxu0 0.0
    %2045 = vmatprep.subr.mxu0 0.0
    %2046 = vmatpush2.msra.mxu0 0.0
    %2047 = vmatprep.subr.mxu0 0.0
    %2048 = vmatpush2.msra.mxu0 0.0
    %2049 = vmatprep.subr.mxu0 0.0
    %2050 = vmatpush2.msra.mxu0 0.0
    %2051 = vmatprep.subr.mxu0 0.0
    %2052 = vmatpush2.msra.mxu0 0.0
    %2053 = vmatprep.subr.mxu0 0.0
    %2054 = vmatpush2.msra.mxu0 0.0
    %2055 = vmatprep.subr.mxu0 0.0
    %2056 = vmatpush2.msra.mxu0 0.0
    %2057 = vmatprep.subr.mxu0 0.0
    %2058 = vmatpush2.msra.mxu0 0.0
    %2059 = vmatprep.subr.mxu0 0.0
    %2060 = vmatpush2.msra.mxu0 0.0
    %2061 = vmatprep.subr.mxu0 0.0
    %2062 = vmatpush2.msra.mxu0 0.0
    %2063 = vmatprep.subr.mxu0 0.0
    %2064 = vmatpush2.msra.mxu0 0.0
    %2065 = vmatprep.subr.mxu0 0.0
    %2066 = vmatpush2.msra.mxu0 0.0
    %2067 = vmatprep.subr.mxu0 0.0
    %2068 = vmatpush2.msra.mxu0 0.0
    %2069 = vmatprep.mubr.f32.mxu0 0.0
    %2070 = vmatmul.mubr.f32.gmra.mxu0 %v1994
    %v2071 = vpop.f32.mrf.mxu0
    %v2072 = vadd.f32 0.0, %v2071
    %v2073 = vpop.f32.mrf.mxu0
    %2074 = vmatprep.mubr.f32.mxu0 0.0
    %2075 = vmatmul.mubr.f32.gmra.mxu0 %v1997
    %v2076 = vpop.f32.mrf.mxu0
    %v2077 = vadd.f32 0.0, %v2076
    %v2078 = vpop.f32.mrf.mxu0
    %2079 = vmatprep.mubr.f32.mxu0 0.0
    %2080 = vmatmul.mubr.f32.gmra.mxu0 %v2000
    %v2081 = vpop.f32.mrf.mxu0
    %v2082 = vadd.f32 0.0, %v2081
    %v2083 = vpop.f32.mrf.mxu0
    %2084 = vmatprep.mubr.f32.mxu0 0.0
    %2085 = vmatmul.mubr.f32.gmra.mxu0 %v2003
    %v2086 = vpop.f32.mrf.mxu0
    %v2087 = vadd.f32 0.0, %v2086
    %v2088 = vpop.f32.mrf.mxu0
    %2089 = vdwg.mxu0
    %2090 = vxpose.xlu0.b32.start [1/16] %v275, 128
    %2091 = vxpose.xlu0.b32.cont [2/16] 0.0, 128
    %2092 = vxpose.xlu0.b32.cont [3/16] 0.0, 128
    %2093 = vxpose.xlu0.b32.cont [4/16] 0.0, 128
    %2094 = vxpose.xlu0.b32.cont [5/16] 0.0, 128
    %2095 = vxpose.xlu0.b32.cont [6/16] 0.0, 128
    %2096 = vxpose.xlu0.b32.cont [7/16] 0.0, 128
    %2097 = vxpose.xlu0.b32.cont [8/16] 0.0, 128
    %2098 = vxpose.xlu0.b32.cont [9/16] 0.0, 128
    %2099 = vxpose.xlu0.b32.cont [10/16] 0.0, 128
    %2100 = vxpose.xlu0.b32.cont [11/16] 0.0, 128
    %2101 = vxpose.xlu0.b32.cont [12/16] 0.0, 128
    %2102 = vxpose.xlu0.b32.cont [13/16] 0.0, 128
    %2103 = vxpose.xlu0.b32.cont [14/16] 0.0, 128
    %2104 = vxpose.xlu0.b32.cont [15/16] 0.0, 128
    %2105 = vxpose.xlu0.b32.end [16/16] 0.0, 128
    %v2106 = vpop.trf.xlu0
    %v2107 = vpop.trf.xlu0
    %v2108 = vpop.trf.xlu0
    %v2109 = vpop.trf.xlu0
    %v2110 = vpop.trf.xlu0
    %v2111 = vpop.trf.xlu0
    %v2112 = vpop.trf.xlu0
    %v2113 = vpop.trf.xlu0
    %v2114 = vpop.trf.xlu0
    %v2115 = vpop.trf.xlu0
    %v2116 = vpop.trf.xlu0
    %v2117 = vpop.trf.xlu0
    %v2118 = vpop.trf.xlu0
    %v2119 = vpop.trf.xlu0
    %v2120 = vpop.trf.xlu0
    %v2121 = vpop.trf.xlu0
    %v2123 = vsel %vm315, %v2106, 0
    %v2126 = vsel %vm315, %v2107, 0
    %v2129 = vsel %vm315, %v2108, 0
    %v2132 = vsel %vm315, %v2109, 0
    %2134 = vmatprep.subr.mxu0 0.0
    %2135 = vmatpush1.msra.mxu0 0.0
    %2136 = vmatprep.subr.mxu0 0.0
    %2137 = vmatpush1.msra.mxu0 0.0
    %2138 = vmatprep.subr.mxu0 0.0
    %2139 = vmatpush1.msra.mxu0 0.0
    %2140 = vmatprep.subr.mxu0 0.0
    %2141 = vmatpush1.msra.mxu0 0.0
    %2142 = vmatprep.subr.mxu0 0.0
    %2143 = vmatpush1.msra.mxu0 0.0
    %2144 = vmatprep.subr.mxu0 0.0
    %2145 = vmatpush1.msra.mxu0 0.0
    %2146 = vmatprep.subr.mxu0 0.0
    %2147 = vmatpush1.msra.mxu0 0.0
    %2148 = vmatprep.subr.mxu0 0.0
    %2149 = vmatpush1.msra.mxu0 0.0
    %2150 = vmatprep.subr.mxu0 0.0
    %2151 = vmatpush1.msra.mxu0 0.0
    %2152 = vmatprep.subr.mxu0 0.0
    %2153 = vmatpush1.msra.mxu0 0.0
    %2154 = vmatprep.subr.mxu0 0.0
    %2155 = vmatpush1.msra.mxu0 0.0
    %2156 = vmatprep.subr.mxu0 0.0
    %2157 = vmatpush1.msra.mxu0 0.0
    %2158 = vmatprep.subr.mxu0 0.0
    %2159 = vmatpush1.msra.mxu0 0.0
    %2160 = vmatprep.subr.mxu0 0.0
    %2161 = vmatpush1.msra.mxu0 0.0
    %2162 = vmatprep.subr.mxu0 0.0
    %2163 = vmatpush1.msra.mxu0 0.0
    %2164 = vmatprep.subr.mxu0 0.0
    %2165 = vmatpush1.msra.mxu0 %v275
    %2166 = vmatprep.subr.mxu0 0.0
    %2167 = vmatpush2.msra.mxu0 0.0
    %2168 = vmatprep.subr.mxu0 0.0
    %2169 = vmatpush2.msra.mxu0 0.0
    %2170 = vmatprep.subr.mxu0 0.0
    %2171 = vmatpush2.msra.mxu0 0.0
    %2172 = vmatprep.subr.mxu0 0.0
    %2173 = vmatpush2.msra.mxu0 0.0
    %2174 = vmatprep.subr.mxu0 0.0
    %2175 = vmatpush2.msra.mxu0 0.0
    %2176 = vmatprep.subr.mxu0 0.0
    %2177 = vmatpush2.msra.mxu0 0.0
    %2178 = vmatprep.subr.mxu0 0.0
    %2179 = vmatpush2.msra.mxu0 0.0
    %2180 = vmatprep.subr.mxu0 0.0
    %2181 = vmatpush2.msra.mxu0 0.0
    %2182 = vmatprep.subr.mxu0 0.0
    %2183 = vmatpush2.msra.mxu0 0.0
    %2184 = vmatprep.subr.mxu0 0.0
    %2185 = vmatpush2.msra.mxu0 0.0
    %2186 = vmatprep.subr.mxu0 0.0
    %2187 = vmatpush2.msra.mxu0 0.0
    %2188 = vmatprep.subr.mxu0 0.0
    %2189 = vmatpush2.msra.mxu0 0.0
    %2190 = vmatprep.subr.mxu0 0.0
    %2191 = vmatpush2.msra.mxu0 0.0
    %2192 = vmatprep.subr.mxu0 0.0
    %2193 = vmatpush2.msra.mxu0 0.0
    %2194 = vmatprep.subr.mxu0 0.0
    %2195 = vmatpush2.msra.mxu0 0.0
    %2196 = vmatprep.subr.mxu0 0.0
    %2197 = vmatpush2.msra.mxu0 0.0
    %2198 = vmatprep.mubr.f32.mxu0 0.0
    %2199 = vmatmul.mubr.f32.gmra.mxu0 %v2123
    %v2200 = vpop.f32.mrf.mxu0
    %v2201 = vadd.f32 0.0, %v2200
    %v2202 = vpop.f32.mrf.mxu0
    %2203 = vmatprep.mubr.f32.mxu0 0.0
    %2204 = vmatmul.mubr.f32.gmra.mxu0 %v2126
    %v2205 = vpop.f32.mrf.mxu0
    %v2206 = vadd.f32 0.0, %v2205
    %v2207 = vpop.f32.mrf.mxu0
    %2208 = vmatprep.mubr.f32.mxu0 0.0
    %2209 = vmatmul.mubr.f32.gmra.mxu0 %v2129
    %v2210 = vpop.f32.mrf.mxu0
    %v2211 = vadd.f32 0.0, %v2210
    %v2212 = vpop.f32.mrf.mxu0
    %2213 = vmatprep.mubr.f32.mxu0 0.0
    %2214 = vmatmul.mubr.f32.gmra.mxu0 %v2132
    %v2215 = vpop.f32.mrf.mxu0
    %v2216 = vadd.f32 0.0, %v2215
    %v2217 = vpop.f32.mrf.mxu0
    %2218 = vdwg.mxu0
    %2219 = vxpose.xlu0.b32.start [1/16] %v280, 128
    %2220 = vxpose.xlu0.b32.cont [2/16] 0.0, 128
    %2221 = vxpose.xlu0.b32.cont [3/16] 0.0, 128
    %2222 = vxpose.xlu0.b32.cont [4/16] 0.0, 128
    %2223 = vxpose.xlu0.b32.cont [5/16] 0.0, 128
    %2224 = vxpose.xlu0.b32.cont [6/16] 0.0, 128
    %2225 = vxpose.xlu0.b32.cont [7/16] 0.0, 128
    %2226 = vxpose.xlu0.b32.cont [8/16] 0.0, 128
    %2227 = vxpose.xlu0.b32.cont [9/16] 0.0, 128
    %2228 = vxpose.xlu0.b32.cont [10/16] 0.0, 128
    %2229 = vxpose.xlu0.b32.cont [11/16] 0.0, 128
    %2230 = vxpose.xlu0.b32.cont [12/16] 0.0, 128
    %2231 = vxpose.xlu0.b32.cont [13/16] 0.0, 128
    %2232 = vxpose.xlu0.b32.cont [14/16] 0.0, 128
    %2233 = vxpose.xlu0.b32.cont [15/16] 0.0, 128
    %2234 = vxpose.xlu0.b32.end [16/16] 0.0, 128
    %v2235 = vpop.trf.xlu0
    %v2236 = vpop.trf.xlu0
    %v2237 = vpop.trf.xlu0
    %v2238 = vpop.trf.xlu0
    %v2239 = vpop.trf.xlu0
    %v2240 = vpop.trf.xlu0
    %v2241 = vpop.trf.xlu0
    %v2242 = vpop.trf.xlu0
    %v2243 = vpop.trf.xlu0
    %v2244 = vpop.trf.xlu0
    %v2245 = vpop.trf.xlu0
    %v2246 = vpop.trf.xlu0
    %v2247 = vpop.trf.xlu0
    %v2248 = vpop.trf.xlu0
    %v2249 = vpop.trf.xlu0
    %v2250 = vpop.trf.xlu0
    %v2252 = vsel %vm315, %v2235, 0
    %v2255 = vsel %vm315, %v2236, 0
    %v2258 = vsel %vm315, %v2237, 0
    %v2261 = vsel %vm315, %v2238, 0
    %2263 = vmatprep.subr.mxu0 0.0
    %2264 = vmatpush1.msra.mxu0 0.0
    %2265 = vmatprep.subr.mxu0 0.0
    %2266 = vmatpush1.msra.mxu0 0.0
    %2267 = vmatprep.subr.mxu0 0.0
    %2268 = vmatpush1.msra.mxu0 0.0
    %2269 = vmatprep.subr.mxu0 0.0
    %2270 = vmatpush1.msra.mxu0 0.0
    %2271 = vmatprep.subr.mxu0 0.0
    %2272 = vmatpush1.msra.mxu0 0.0
    %2273 = vmatprep.subr.mxu0 0.0
    %2274 = vmatpush1.msra.mxu0 0.0
    %2275 = vmatprep.subr.mxu0 0.0
    %2276 = vmatpush1.msra.mxu0 0.0
    %2277 = vmatprep.subr.mxu0 0.0
    %2278 = vmatpush1.msra.mxu0 0.0
    %2279 = vmatprep.subr.mxu0 0.0
    %2280 = vmatpush1.msra.mxu0 0.0
    %2281 = vmatprep.subr.mxu0 0.0
    %2282 = vmatpush1.msra.mxu0 0.0
    %2283 = vmatprep.subr.mxu0 0.0
    %2284 = vmatpush1.msra.mxu0 0.0
    %2285 = vmatprep.subr.mxu0 0.0
    %2286 = vmatpush1.msra.mxu0 0.0
    %2287 = vmatprep.subr.mxu0 0.0
    %2288 = vmatpush1.msra.mxu0 0.0
    %2289 = vmatprep.subr.mxu0 0.0
    %2290 = vmatpush1.msra.mxu0 0.0
    %2291 = vmatprep.subr.mxu0 0.0
    %2292 = vmatpush1.msra.mxu0 0.0
    %2293 = vmatprep.subr.mxu0 0.0
    %2294 = vmatpush1.msra.mxu0 %v280
    %2295 = vmatprep.subr.mxu0 0.0
    %2296 = vmatpush2.msra.mxu0 0.0
    %2297 = vmatprep.subr.mxu0 0.0
    %2298 = vmatpush2.msra.mxu0 0.0
    %2299 = vmatprep.subr.mxu0 0.0
    %2300 = vmatpush2.msra.mxu0 0.0
    %2301 = vmatprep.subr.mxu0 0.0
    %2302 = vmatpush2.msra.mxu0 0.0
    %2303 = vmatprep.subr.mxu0 0.0
    %2304 = vmatpush2.msra.mxu0 0.0
    %2305 = vmatprep.subr.mxu0 0.0
    %2306 = vmatpush2.msra.mxu0 0.0
    %2307 = vmatprep.subr.mxu0 0.0
    %2308 = vmatpush2.msra.mxu0 0.0
    %2309 = vmatprep.subr.mxu0 0.0
    %2310 = vmatpush2.msra.mxu0 0.0
    %2311 = vmatprep.subr.mxu0 0.0
    %2312 = vmatpush2.msra.mxu0 0.0
    %2313 = vmatprep.subr.mxu0 0.0
    %2314 = vmatpush2.msra.mxu0 0.0
    %2315 = vmatprep.subr.mxu0 0.0
    %2316 = vmatpush2.msra.mxu0 0.0
    %2317 = vmatprep.subr.mxu0 0.0
    %2318 = vmatpush2.msra.mxu0 0.0
    %2319 = vmatprep.subr.mxu0 0.0
    %2320 = vmatpush2.msra.mxu0 0.0
    %2321 = vmatprep.subr.mxu0 0.0
    %2322 = vmatpush2.msra.mxu0 0.0
    %2323 = vmatprep.subr.mxu0 0.0
    %2324 = vmatpush2.msra.mxu0 0.0
    %2325 = vmatprep.subr.mxu0 0.0
    %2326 = vmatpush2.msra.mxu0 0.0
    %2327 = vmatprep.mubr.f32.mxu0 0.0
    %2328 = vmatmul.mubr.f32.gmra.mxu0 %v2252
    %v2329 = vpop.f32.mrf.mxu0
    %v2330 = vadd.f32 0.0, %v2329
    %v2331 = vpop.f32.mrf.mxu0
    %2332 = vmatprep.mubr.f32.mxu0 0.0
    %2333 = vmatmul.mubr.f32.gmra.mxu0 %v2255
    %v2334 = vpop.f32.mrf.mxu0
    %v2335 = vadd.f32 0.0, %v2334
    %v2336 = vpop.f32.mrf.mxu0
    %2337 = vmatprep.mubr.f32.mxu0 0.0
    %2338 = vmatmul.mubr.f32.gmra.mxu0 %v2258
    %v2339 = vpop.f32.mrf.mxu0
    %v2340 = vadd.f32 0.0, %v2339
    %v2341 = vpop.f32.mrf.mxu0
    %2342 = vmatprep.mubr.f32.mxu0 0.0
    %2343 = vmatmul.mubr.f32.gmra.mxu0 %v2261
    %v2344 = vpop.f32.mrf.mxu0
    %v2345 = vadd.f32 0.0, %v2344
    %v2346 = vpop.f32.mrf.mxu0
    %2347 = vdwg.mxu0
    %v2348 = vmax.f32 %v395, 0.0
    %v2349 = vmax.f32 %v400, 0.0
    %v2350 = vmax.f32 %v405, 0.0
    %v2351 = vmax.f32 %v410, 0.0
    %v2352 = vmax.f32 %v524, 0.0
    %v2353 = vmax.f32 %v529, 0.0
    %v2354 = vmax.f32 %v534, 0.0
    %v2355 = vmax.f32 %v539, 0.0
    %v2356 = vmax.f32 %v653, 0.0
    %v2357 = vmax.f32 %v658, 0.0
    %v2358 = vmax.f32 %v663, 0.0
    %v2359 = vmax.f32 %v668, 0.0
    %v2360 = vmax.f32 %v782, 0.0
    %v2361 = vmax.f32 %v787, 0.0
    %v2362 = vmax.f32 %v792, 0.0
    %v2363 = vmax.f32 %v797, 0.0
    %v2364 = vmax.f32 %v911, 0.0
    %v2365 = vmax.f32 %v916, 0.0
    %v2366 = vmax.f32 %v921, 0.0
    %v2367 = vmax.f32 %v926, 0.0
    %v2368 = vmax.f32 %v1040, 0.0
    %v2369 = vmax.f32 %v1045, 0.0
    %v2370 = vmax.f32 %v1050, 0.0
    %v2371 = vmax.f32 %v1055, 0.0
    %v2372 = vmax.f32 %v1169, 0.0
    %v2373 = vmax.f32 %v1174, 0.0
    %v2374 = vmax.f32 %v1179, 0.0
    %v2375 = vmax.f32 %v1184, 0.0
    %v2376 = vmax.f32 %v1298, 0.0
    %v2377 = vmax.f32 %v1303, 0.0
    %v2378 = vmax.f32 %v1308, 0.0
    %v2379 = vmax.f32 %v1313, 0.0
    %v2380 = vmax.f32 %v1427, 0.0
    %v2381 = vmax.f32 %v1432, 0.0
    %v2382 = vmax.f32 %v1437, 0.0
    %v2383 = vmax.f32 %v1442, 0.0
    %v2384 = vmax.f32 %v1556, 0.0
    %v2385 = vmax.f32 %v1561, 0.0
    %v2386 = vmax.f32 %v1566, 0.0
    %v2387 = vmax.f32 %v1571, 0.0
    %v2388 = vmax.f32 %v1685, 0.0
    %v2389 = vmax.f32 %v1690, 0.0
    %v2390 = vmax.f32 %v1695, 0.0
    %v2391 = vmax.f32 %v1700, 0.0
    %v2392 = vmax.f32 %v1814, 0.0
    %v2393 = vmax.f32 %v1819, 0.0
    %v2394 = vmax.f32 %v1824, 0.0
    %v2395 = vmax.f32 %v1829, 0.0
    %v2396 = vmax.f32 %v1943, 0.0
    %v2397 = vmax.f32 %v1948, 0.0
    %v2398 = vmax.f32 %v1953, 0.0
    %v2399 = vmax.f32 %v1958, 0.0
    %v2400 = vmax.f32 %v2072, 0.0
    %v2401 = vmax.f32 %v2077, 0.0
    %v2402 = vmax.f32 %v2082, 0.0
    %v2403 = vmax.f32 %v2087, 0.0
    %v2404 = vmax.f32 %v2201, 0.0
    %v2405 = vmax.f32 %v2206, 0.0
    %v2406 = vmax.f32 %v2211, 0.0
    %v2407 = vmax.f32 %v2216, 0.0
    %v2408 = vmax.f32 %v2330, 0.0
    %v2409 = vmax.f32 %v2335, 0.0
    %v2410 = vmax.f32 %v2340, 0.0
    %v2411 = vmax.f32 %v2345, 0.0
    %v2412 = vld [vmem:[%s3] sm:$0x1]
    %v2414 = vlaneseq
    %v2415 = vshrl.u32 %v2414, 7
    %v2416 = vsub.s32 0, %v2415
    %v2417 = vrot.slane %v2412, %v2416
    %v2419 = vmul.f32 %v2348, %v2417
    %v2420 = vmul.f32 %v2349, %v2417
    %v2421 = vmul.f32 %v2350, %v2417
    %v2422 = vmul.f32 %v2351, %v2417
    %v2423 = vmul.f32 %v2352, %v2417
    %v2424 = vmul.f32 %v2353, %v2417
    %v2425 = vmul.f32 %v2354, %v2417
    %v2426 = vmul.f32 %v2355, %v2417
    %v2427 = vmul.f32 %v2356, %v2417
    %v2428 = vmul.f32 %v2357, %v2417
    %v2429 = vmul.f32 %v2358, %v2417
    %v2430 = vmul.f32 %v2359, %v2417
    %v2431 = vmul.f32 %v2360, %v2417
    %v2432 = vmul.f32 %v2361, %v2417
    %v2433 = vmul.f32 %v2362, %v2417
    %v2434 = vmul.f32 %v2363, %v2417
    %v2435 = vmul.f32 %v2364, %v2417
    %v2436 = vmul.f32 %v2365, %v2417
    %v2437 = vmul.f32 %v2366, %v2417
    %v2438 = vmul.f32 %v2367, %v2417
    %v2439 = vmul.f32 %v2368, %v2417
    %v2440 = vmul.f32 %v2369, %v2417
    %v2441 = vmul.f32 %v2370, %v2417
    %v2442 = vmul.f32 %v2371, %v2417
    %v2443 = vmul.f32 %v2372, %v2417
    %v2444 = vmul.f32 %v2373, %v2417
    %v2445 = vmul.f32 %v2374, %v2417
    %v2446 = vmul.f32 %v2375, %v2417
    %v2447 = vmul.f32 %v2376, %v2417
    %v2448 = vmul.f32 %v2377, %v2417
    %v2449 = vmul.f32 %v2378, %v2417
    %v2450 = vmul.f32 %v2379, %v2417
    %v2451 = vmul.f32 %v2380, %v2417
    %v2452 = vmul.f32 %v2381, %v2417
    %v2453 = vmul.f32 %v2382, %v2417
    %v2454 = vmul.f32 %v2383, %v2417
    %v2455 = vmul.f32 %v2384, %v2417
    %v2456 = vmul.f32 %v2385, %v2417
    %v2457 = vmul.f32 %v2386, %v2417
    %v2458 = vmul.f32 %v2387, %v2417
    %v2459 = vmul.f32 %v2388, %v2417
    %v2460 = vmul.f32 %v2389, %v2417
    %v2461 = vmul.f32 %v2390, %v2417
    %v2462 = vmul.f32 %v2391, %v2417
    %v2463 = vmul.f32 %v2392, %v2417
    %v2464 = vmul.f32 %v2393, %v2417
    %v2465 = vmul.f32 %v2394, %v2417
    %v2466 = vmul.f32 %v2395, %v2417
    %v2467 = vmul.f32 %v2396, %v2417
    %v2468 = vmul.f32 %v2397, %v2417
    %v2469 = vmul.f32 %v2398, %v2417
    %v2470 = vmul.f32 %v2399, %v2417
    %v2471 = vmul.f32 %v2400, %v2417
    %v2472 = vmul.f32 %v2401, %v2417
    %v2473 = vmul.f32 %v2402, %v2417
    %v2474 = vmul.f32 %v2403, %v2417
    %v2475 = vmul.f32 %v2404, %v2417
    %v2476 = vmul.f32 %v2405, %v2417
    %v2477 = vmul.f32 %v2406, %v2417
    %v2478 = vmul.f32 %v2407, %v2417
    %v2479 = vmul.f32 %v2408, %v2417
    %v2480 = vmul.f32 %v2409, %v2417
    %v2481 = vmul.f32 %v2410, %v2417
    %v2482 = vmul.f32 %v2411, %v2417
    %v2483 = vsel %vm77, %v2419, 0.0
    %2484 = vadd.xlane.f32.xlu0 %v2483
    %v2485 = vpop.xlane.xlu0 %2484
    %v2486 = vsel %vm77, %v2420, 0.0
    %2487 = vadd.xlane.f32.xlu0 %v2486
    %v2488 = vpop.xlane.xlu0 %2487
    %v2489 = vsel %vm77, %v2421, 0.0
    %2490 = vadd.xlane.f32.xlu0 %v2489
    %v2491 = vpop.xlane.xlu0 %2490
    %v2492 = vsel %vm77, %v2422, 0.0
    %2493 = vadd.xlane.f32.xlu0 %v2492
    %v2494 = vpop.xlane.xlu0 %2493
    %v2495 = vsel %vm77, %v2423, 0.0
    %2496 = vadd.xlane.f32.xlu0 %v2495
    %v2497 = vpop.xlane.xlu0 %2496
    %v2498 = vsel %vm77, %v2424, 0.0
    %2499 = vadd.xlane.f32.xlu0 %v2498
    %v2500 = vpop.xlane.xlu0 %2499
    %v2501 = vsel %vm77, %v2425, 0.0
    %2502 = vadd.xlane.f32.xlu0 %v2501
    %v2503 = vpop.xlane.xlu0 %2502
    %v2504 = vsel %vm77, %v2426, 0.0
    %2505 = vadd.xlane.f32.xlu0 %v2504
    %v2506 = vpop.xlane.xlu0 %2505
    %v2507 = vsel %vm77, %v2427, 0.0
    %2508 = vadd.xlane.f32.xlu0 %v2507
    %v2509 = vpop.xlane.xlu0 %2508
    %v2510 = vsel %vm77, %v2428, 0.0
    %2511 = vadd.xlane.f32.xlu0 %v2510
    %v2512 = vpop.xlane.xlu0 %2511
    %v2513 = vsel %vm77, %v2429, 0.0
    %2514 = vadd.xlane.f32.xlu0 %v2513
    %v2515 = vpop.xlane.xlu0 %2514
    %v2516 = vsel %vm77, %v2430, 0.0
    %2517 = vadd.xlane.f32.xlu0 %v2516
    %v2518 = vpop.xlane.xlu0 %2517
    %v2519 = vsel %vm77, %v2431, 0.0
    %2520 = vadd.xlane.f32.xlu0 %v2519
    %v2521 = vpop.xlane.xlu0 %2520
    %v2522 = vsel %vm77, %v2432, 0.0
    %2523 = vadd.xlane.f32.xlu0 %v2522
    %v2524 = vpop.xlane.xlu0 %2523
    %v2525 = vsel %vm77, %v2433, 0.0
    %2526 = vadd.xlane.f32.xlu0 %v2525
    %v2527 = vpop.xlane.xlu0 %2526
    %v2528 = vsel %vm77, %v2434, 0.0
    %2529 = vadd.xlane.f32.xlu0 %v2528
    %v2530 = vpop.xlane.xlu0 %2529
    %v2531 = vsel %vm77, %v2435, 0.0
    %2532 = vadd.xlane.f32.xlu0 %v2531
    %v2533 = vpop.xlane.xlu0 %2532
    %v2534 = vsel %vm77, %v2436, 0.0
    %2535 = vadd.xlane.f32.xlu0 %v2534
    %v2536 = vpop.xlane.xlu0 %2535
    %v2537 = vsel %vm77, %v2437, 0.0
    %2538 = vadd.xlane.f32.xlu0 %v2537
    %v2539 = vpop.xlane.xlu0 %2538
    %v2540 = vsel %vm77, %v2438, 0.0
    %2541 = vadd.xlane.f32.xlu0 %v2540
    %v2542 = vpop.xlane.xlu0 %2541
    %v2543 = vsel %vm77, %v2439, 0.0
    %2544 = vadd.xlane.f32.xlu0 %v2543
    %v2545 = vpop.xlane.xlu0 %2544
    %v2546 = vsel %vm77, %v2440, 0.0
    %2547 = vadd.xlane.f32.xlu0 %v2546
    %v2548 = vpop.xlane.xlu0 %2547
    %v2549 = vsel %vm77, %v2441, 0.0
    %2550 = vadd.xlane.f32.xlu0 %v2549
    %v2551 = vpop.xlane.xlu0 %2550
    %v2552 = vsel %vm77, %v2442, 0.0
    %2553 = vadd.xlane.f32.xlu0 %v2552
    %v2554 = vpop.xlane.xlu0 %2553
    %v2555 = vsel %vm77, %v2443, 0.0
    %2556 = vadd.xlane.f32.xlu0 %v2555
    %v2557 = vpop.xlane.xlu0 %2556
    %v2558 = vsel %vm77, %v2444, 0.0
    %2559 = vadd.xlane.f32.xlu0 %v2558
    %v2560 = vpop.xlane.xlu0 %2559
    %v2561 = vsel %vm77, %v2445, 0.0
    %2562 = vadd.xlane.f32.xlu0 %v2561
    %v2563 = vpop.xlane.xlu0 %2562
    %v2564 = vsel %vm77, %v2446, 0.0
    %2565 = vadd.xlane.f32.xlu0 %v2564
    %v2566 = vpop.xlane.xlu0 %2565
    %v2567 = vsel %vm77, %v2447, 0.0
    %2568 = vadd.xlane.f32.xlu0 %v2567
    %v2569 = vpop.xlane.xlu0 %2568
    %v2570 = vsel %vm77, %v2448, 0.0
    %2571 = vadd.xlane.f32.xlu0 %v2570
    %v2572 = vpop.xlane.xlu0 %2571
    %v2573 = vsel %vm77, %v2449, 0.0
    %2574 = vadd.xlane.f32.xlu0 %v2573
    %v2575 = vpop.xlane.xlu0 %2574
    %v2576 = vsel %vm77, %v2450, 0.0
    %2577 = vadd.xlane.f32.xlu0 %v2576
    %v2578 = vpop.xlane.xlu0 %2577
    %v2579 = vsel %vm77, %v2451, 0.0
    %2580 = vadd.xlane.f32.xlu0 %v2579
    %v2581 = vpop.xlane.xlu0 %2580
    %v2582 = vsel %vm77, %v2452, 0.0
    %2583 = vadd.xlane.f32.xlu0 %v2582
    %v2584 = vpop.xlane.xlu0 %2583
    %v2585 = vsel %vm77, %v2453, 0.0
    %2586 = vadd.xlane.f32.xlu0 %v2585
    %v2587 = vpop.xlane.xlu0 %2586
    %v2588 = vsel %vm77, %v2454, 0.0
    %2589 = vadd.xlane.f32.xlu0 %v2588
    %v2590 = vpop.xlane.xlu0 %2589
    %v2591 = vsel %vm77, %v2455, 0.0
    %2592 = vadd.xlane.f32.xlu0 %v2591
    %v2593 = vpop.xlane.xlu0 %2592
    %v2594 = vsel %vm77, %v2456, 0.0
    %2595 = vadd.xlane.f32.xlu0 %v2594
    %v2596 = vpop.xlane.xlu0 %2595
    %v2597 = vsel %vm77, %v2457, 0.0
    %2598 = vadd.xlane.f32.xlu0 %v2597
    %v2599 = vpop.xlane.xlu0 %2598
    %v2600 = vsel %vm77, %v2458, 0.0
    %2601 = vadd.xlane.f32.xlu0 %v2600
    %v2602 = vpop.xlane.xlu0 %2601
    %v2603 = vsel %vm77, %v2459, 0.0
    %2604 = vadd.xlane.f32.xlu0 %v2603
    %v2605 = vpop.xlane.xlu0 %2604
    %v2606 = vsel %vm77, %v2460, 0.0
    %2607 = vadd.xlane.f32.xlu0 %v2606
    %v2608 = vpop.xlane.xlu0 %2607
    %v2609 = vsel %vm77, %v2461, 0.0
    %2610 = vadd.xlane.f32.xlu0 %v2609
    %v2611 = vpop.xlane.xlu0 %2610
    %v2612 = vsel %vm77, %v2462, 0.0
    %2613 = vadd.xlane.f32.xlu0 %v2612
    %v2614 = vpop.xlane.xlu0 %2613
    %v2615 = vsel %vm77, %v2463, 0.0
    %2616 = vadd.xlane.f32.xlu0 %v2615
    %v2617 = vpop.xlane.xlu0 %2616
    %v2618 = vsel %vm77, %v2464, 0.0
    %2619 = vadd.xlane.f32.xlu0 %v2618
    %v2620 = vpop.xlane.xlu0 %2619
    %v2621 = vsel %vm77, %v2465, 0.0
    %2622 = vadd.xlane.f32.xlu0 %v2621
    %v2623 = vpop.xlane.xlu0 %2622
    %v2624 = vsel %vm77, %v2466, 0.0
    %2625 = vadd.xlane.f32.xlu0 %v2624
    %v2626 = vpop.xlane.xlu0 %2625
    %v2627 = vsel %vm77, %v2467, 0.0
    %2628 = vadd.xlane.f32.xlu0 %v2627
    %v2629 = vpop.xlane.xlu0 %2628
    %v2630 = vsel %vm77, %v2468, 0.0
    %2631 = vadd.xlane.f32.xlu0 %v2630
    %v2632 = vpop.xlane.xlu0 %2631
    %v2633 = vsel %vm77, %v2469, 0.0
    %2634 = vadd.xlane.f32.xlu0 %v2633
    %v2635 = vpop.xlane.xlu0 %2634
    %v2636 = vsel %vm77, %v2470, 0.0
    %2637 = vadd.xlane.f32.xlu0 %v2636
    %v2638 = vpop.xlane.xlu0 %2637
    %v2639 = vsel %vm77, %v2471, 0.0
    %2640 = vadd.xlane.f32.xlu0 %v2639
    %v2641 = vpop.xlane.xlu0 %2640
    %v2642 = vsel %vm77, %v2472, 0.0
    %2643 = vadd.xlane.f32.xlu0 %v2642
    %v2644 = vpop.xlane.xlu0 %2643
    %v2645 = vsel %vm77, %v2473, 0.0
    %2646 = vadd.xlane.f32.xlu0 %v2645
    %v2647 = vpop.xlane.xlu0 %2646
    %v2648 = vsel %vm77, %v2474, 0.0
    %2649 = vadd.xlane.f32.xlu0 %v2648
    %v2650 = vpop.xlane.xlu0 %2649
    %v2651 = vsel %vm77, %v2475, 0.0
    %2652 = vadd.xlane.f32.xlu0 %v2651
    %v2653 = vpop.xlane.xlu0 %2652
    %v2654 = vsel %vm77, %v2476, 0.0
    %2655 = vadd.xlane.f32.xlu0 %v2654
    %v2656 = vpop.xlane.xlu0 %2655
    %v2657 = vsel %vm77, %v2477, 0.0
    %2658 = vadd.xlane.f32.xlu0 %v2657
    %v2659 = vpop.xlane.xlu0 %2658
    %v2660 = vsel %vm77, %v2478, 0.0
    %2661 = vadd.xlane.f32.xlu0 %v2660
    %v2662 = vpop.xlane.xlu0 %2661
    %v2663 = vsel %vm77, %v2479, 0.0
    %2664 = vadd.xlane.f32.xlu0 %v2663
    %v2665 = vpop.xlane.xlu0 %2664
    %v2666 = vsel %vm77, %v2480, 0.0
    %2667 = vadd.xlane.f32.xlu0 %v2666
    %v2668 = vpop.xlane.xlu0 %2667
    %v2669 = vsel %vm77, %v2481, 0.0
    %2670 = vadd.xlane.f32.xlu0 %v2669
    %v2671 = vpop.xlane.xlu0 %2670
    %v2672 = vsel %vm77, %v2482, 0.0
    %2673 = vadd.xlane.f32.xlu0 %v2672
    %v2674 = vpop.xlane.xlu0 %2673
    %s2675 = sld [smem:[#allocation2]]
    %v2676 = vstv %s2675
    %v2677 = vadd.f32 %v2485, %v2676
    %v2678 = vadd.f32 %v2488, %v2676
    %v2679 = vadd.f32 %v2491, %v2676
    %v2680 = vadd.f32 %v2494, %v2676
    %v2681 = vadd.f32 %v2497, %v2676
    %v2682 = vadd.f32 %v2500, %v2676
    %v2683 = vadd.f32 %v2503, %v2676
    %v2684 = vadd.f32 %v2506, %v2676
    %v2685 = vadd.f32 %v2509, %v2676
    %v2686 = vadd.f32 %v2512, %v2676
    %v2687 = vadd.f32 %v2515, %v2676
    %v2688 = vadd.f32 %v2518, %v2676
    %v2689 = vadd.f32 %v2521, %v2676
    %v2690 = vadd.f32 %v2524, %v2676
    %v2691 = vadd.f32 %v2527, %v2676
    %v2692 = vadd.f32 %v2530, %v2676
    %v2693 = vadd.f32 %v2533, %v2676
    %v2694 = vadd.f32 %v2536, %v2676
    %v2695 = vadd.f32 %v2539, %v2676
    %v2696 = vadd.f32 %v2542, %v2676
    %v2697 = vadd.f32 %v2545, %v2676
    %v2698 = vadd.f32 %v2548, %v2676
    %v2699 = vadd.f32 %v2551, %v2676
    %v2700 = vadd.f32 %v2554, %v2676
    %v2701 = vadd.f32 %v2557, %v2676
    %v2702 = vadd.f32 %v2560, %v2676
    %v2703 = vadd.f32 %v2563, %v2676
    %v2704 = vadd.f32 %v2566, %v2676
    %v2705 = vadd.f32 %v2569, %v2676
    %v2706 = vadd.f32 %v2572, %v2676
    %v2707 = vadd.f32 %v2575, %v2676
    %v2708 = vadd.f32 %v2578, %v2676
    %v2709 = vadd.f32 %v2581, %v2676
    %v2710 = vadd.f32 %v2584, %v2676
    %v2711 = vadd.f32 %v2587, %v2676
    %v2712 = vadd.f32 %v2590, %v2676
    %v2713 = vadd.f32 %v2593, %v2676
    %v2714 = vadd.f32 %v2596, %v2676
    %v2715 = vadd.f32 %v2599, %v2676
    %v2716 = vadd.f32 %v2602, %v2676
    %v2717 = vadd.f32 %v2605, %v2676
    %v2718 = vadd.f32 %v2608, %v2676
    %v2719 = vadd.f32 %v2611, %v2676
    %v2720 = vadd.f32 %v2614, %v2676
    %v2721 = vadd.f32 %v2617, %v2676
    %v2722 = vadd.f32 %v2620, %v2676
    %v2723 = vadd.f32 %v2623, %v2676
    %v2724 = vadd.f32 %v2626, %v2676
    %v2725 = vadd.f32 %v2629, %v2676
    %v2726 = vadd.f32 %v2632, %v2676
    %v2727 = vadd.f32 %v2635, %v2676
    %v2728 = vadd.f32 %v2638, %v2676
    %v2729 = vadd.f32 %v2641, %v2676
    %v2730 = vadd.f32 %v2644, %v2676
    %v2731 = vadd.f32 %v2647, %v2676
    %v2732 = vadd.f32 %v2650, %v2676
    %v2733 = vadd.f32 %v2653, %v2676
    %v2734 = vadd.f32 %v2656, %v2676
    %v2735 = vadd.f32 %v2659, %v2676
    %v2736 = vadd.f32 %v2662, %v2676
    %v2737 = vadd.f32 %v2665, %v2676
    %v2738 = vadd.f32 %v2668, %v2676
    %v2739 = vadd.f32 %v2671, %v2676
    %v2740 = vadd.f32 %v2674, %v2676
    %v2805 = vlaneseq
    %v2806 = vand.u32 %v2805, 127
    %v2807 = vlaneseq
    %v2808 = vshrl.u32 %v2807, 7
    %v2809 = vsub.s32 %v2806, %v2808
    %v2810 = vrot.slane %v2677, %v2809
    %v2811 = vadd.s32 %v2806, 4294967288
    %v2812 = vlaneseq
    %v2813 = vshrl.u32 %v2812, 7
    %v2814 = vsub.s32 %v2811, %v2813
    %v2815 = vrot.slane %v2678, %v2814
    %vm2816 = vcmask 130112
    %v2817 = vsel %vm2816, %v2815, %v2810
    %v2818 = vadd.s32 %v2806, 4294967280
    %v2819 = vlaneseq
    %v2820 = vshrl.u32 %v2819, 7
    %v2821 = vsub.s32 %v2818, %v2820
    %v2822 = vrot.slane %v2679, %v2821
    %vm2823 = vcmask 195712
    %v2824 = vsel %vm2823, %v2822, %v2817
    %v2825 = vadd.s32 %v2806, 4294967272
    %v2826 = vlaneseq
    %v2827 = vshrl.u32 %v2826, 7
    %v2828 = vsub.s32 %v2825, %v2827
    %v2829 = vrot.slane %v2680, %v2828
    %vm2830 = vcmask 261312
    %v2831 = vsel %vm2830, %v2829, %v2824
    %v2832 = vlaneseq
    %v2833 = vshrl.u32 %v2832, 7
    %v2834 = vsub.s32 %v2806, %v2833
    %v2835 = vrot.slane %v2681, %v2834
    %v2836 = vlaneseq
    %v2837 = vshrl.u32 %v2836, 7
    %v2838 = vsub.s32 %v2811, %v2837
    %v2839 = vrot.slane %v2682, %v2838
    %v2840 = vsel %vm2816, %v2839, %v2835
    %v2841 = vlaneseq
    %v2842 = vshrl.u32 %v2841, 7
    %v2843 = vsub.s32 %v2818, %v2842
    %v2844 = vrot.slane %v2683, %v2843
    %v2845 = vsel %vm2823, %v2844, %v2840
    %v2846 = vlaneseq
    %v2847 = vshrl.u32 %v2846, 7
    %v2848 = vsub.s32 %v2825, %v2847
    %v2849 = vrot.slane %v2684, %v2848
    %v2850 = vsel %vm2830, %v2849, %v2845
    %v2851 = vlaneseq
    %v2852 = vshrl.u32 %v2851, 7
    %v2853 = vsub.s32 %v2806, %v2852
    %v2854 = vrot.slane %v2685, %v2853
    %v2855 = vlaneseq
    %v2856 = vshrl.u32 %v2855, 7
    %v2857 = vsub.s32 %v2811, %v2856
    %v2858 = vrot.slane %v2686, %v2857
    %v2859 = vsel %vm2816, %v2858, %v2854
    %v2860 = vlaneseq
    %v2861 = vshrl.u32 %v2860, 7
    %v2862 = vsub.s32 %v2818, %v2861
    %v2863 = vrot.slane %v2687, %v2862
    %v2864 = vsel %vm2823, %v2863, %v2859
    %v2865 = vlaneseq
    %v2866 = vshrl.u32 %v2865, 7
    %v2867 = vsub.s32 %v2825, %v2866
    %v2868 = vrot.slane %v2688, %v2867
    %v2869 = vsel %vm2830, %v2868, %v2864
    %v2870 = vlaneseq
    %v2871 = vshrl.u32 %v2870, 7
    %v2872 = vsub.s32 %v2806, %v2871
    %v2873 = vrot.slane %v2689, %v2872
    %v2874 = vlaneseq
    %v2875 = vshrl.u32 %v2874, 7
    %v2876 = vsub.s32 %v2811, %v2875
    %v2877 = vrot.slane %v2690, %v2876
    %v2878 = vsel %vm2816, %v2877, %v2873
    %v2879 = vlaneseq
    %v2880 = vshrl.u32 %v2879, 7
    %v2881 = vsub.s32 %v2818, %v2880
    %v2882 = vrot.slane %v2691, %v2881
    %v2883 = vsel %vm2823, %v2882, %v2878
    %v2884 = vlaneseq
    %v2885 = vshrl.u32 %v2884, 7
    %v2886 = vsub.s32 %v2825, %v2885
    %v2887 = vrot.slane %v2692, %v2886
    %v2888 = vsel %vm2830, %v2887, %v2883
    %v2889 = vlaneseq
    %v2890 = vshrl.u32 %v2889, 7
    %v2891 = vsub.s32 %v2806, %v2890
    %v2892 = vrot.slane %v2693, %v2891
    %v2893 = vlaneseq
    %v2894 = vshrl.u32 %v2893, 7
    %v2895 = vsub.s32 %v2811, %v2894
    %v2896 = vrot.slane %v2694, %v2895
    %v2897 = vsel %vm2816, %v2896, %v2892
    %v2898 = vlaneseq
    %v2899 = vshrl.u32 %v2898, 7
    %v2900 = vsub.s32 %v2818, %v2899
    %v2901 = vrot.slane %v2695, %v2900
    %v2902 = vsel %vm2823, %v2901, %v2897
    %v2903 = vlaneseq
    %v2904 = vshrl.u32 %v2903, 7
    %v2905 = vsub.s32 %v2825, %v2904
    %v2906 = vrot.slane %v2696, %v2905
    %v2907 = vsel %vm2830, %v2906, %v2902
    %v2908 = vlaneseq
    %v2909 = vshrl.u32 %v2908, 7
    %v2910 = vsub.s32 %v2806, %v2909
    %v2911 = vrot.slane %v2697, %v2910
    %v2912 = vlaneseq
    %v2913 = vshrl.u32 %v2912, 7
    %v2914 = vsub.s32 %v2811, %v2913
    %v2915 = vrot.slane %v2698, %v2914
    %v2916 = vsel %vm2816, %v2915, %v2911
    %v2917 = vlaneseq
    %v2918 = vshrl.u32 %v2917, 7
    %v2919 = vsub.s32 %v2818, %v2918
    %v2920 = vrot.slane %v2699, %v2919
    %v2921 = vsel %vm2823, %v2920, %v2916
    %v2922 = vlaneseq
    %v2923 = vshrl.u32 %v2922, 7
    %v2924 = vsub.s32 %v2825, %v2923
    %v2925 = vrot.slane %v2700, %v2924
    %v2926 = vsel %vm2830, %v2925, %v2921
    %v2927 = vlaneseq
    %v2928 = vshrl.u32 %v2927, 7
    %v2929 = vsub.s32 %v2806, %v2928
    %v2930 = vrot.slane %v2701, %v2929
    %v2931 = vlaneseq
    %v2932 = vshrl.u32 %v2931, 7
    %v2933 = vsub.s32 %v2811, %v2932
    %v2934 = vrot.slane %v2702, %v2933
    %v2935 = vsel %vm2816, %v2934, %v2930
    %v2936 = vlaneseq
    %v2937 = vshrl.u32 %v2936, 7
    %v2938 = vsub.s32 %v2818, %v2937
    %v2939 = vrot.slane %v2703, %v2938
    %v2940 = vsel %vm2823, %v2939, %v2935
    %v2941 = vlaneseq
    %v2942 = vshrl.u32 %v2941, 7
    %v2943 = vsub.s32 %v2825, %v2942
    %v2944 = vrot.slane %v2704, %v2943
    %v2945 = vsel %vm2830, %v2944, %v2940
    %v2946 = vlaneseq
    %v2947 = vshrl.u32 %v2946, 7
    %v2948 = vsub.s32 %v2806, %v2947
    %v2949 = vrot.slane %v2705, %v2948
    %v2950 = vlaneseq
    %v2951 = vshrl.u32 %v2950, 7
    %v2952 = vsub.s32 %v2811, %v2951
    %v2953 = vrot.slane %v2706, %v2952
    %v2954 = vsel %vm2816, %v2953, %v2949
    %v2955 = vlaneseq
    %v2956 = vshrl.u32 %v2955, 7
    %v2957 = vsub.s32 %v2818, %v2956
    %v2958 = vrot.slane %v2707, %v2957
    %v2959 = vsel %vm2823, %v2958, %v2954
    %v2960 = vlaneseq
    %v2961 = vshrl.u32 %v2960, 7
    %v2962 = vsub.s32 %v2825, %v2961
    %v2963 = vrot.slane %v2708, %v2962
    %v2964 = vsel %vm2830, %v2963, %v2959
    %v2965 = vlaneseq
    %v2966 = vshrl.u32 %v2965, 7
    %v2967 = vsub.s32 %v2806, %v2966
    %v2968 = vrot.slane %v2709, %v2967
    %v2969 = vlaneseq
    %v2970 = vshrl.u32 %v2969, 7
    %v2971 = vsub.s32 %v2811, %v2970
    %v2972 = vrot.slane %v2710, %v2971
    %v2973 = vsel %vm2816, %v2972, %v2968
    %v2974 = vlaneseq
    %v2975 = vshrl.u32 %v2974, 7
    %v2976 = vsub.s32 %v2818, %v2975
    %v2977 = vrot.slane %v2711, %v2976
    %v2978 = vsel %vm2823, %v2977, %v2973
    %v2979 = vlaneseq
    %v2980 = vshrl.u32 %v2979, 7
    %v2981 = vsub.s32 %v2825, %v2980
    %v2982 = vrot.slane %v2712, %v2981
    %v2983 = vsel %vm2830, %v2982, %v2978
    %v2984 = vlaneseq
    %v2985 = vshrl.u32 %v2984, 7
    %v2986 = vsub.s32 %v2806, %v2985
    %v2987 = vrot.slane %v2713, %v2986
    %v2988 = vlaneseq
    %v2989 = vshrl.u32 %v2988, 7
    %v2990 = vsub.s32 %v2811, %v2989
    %v2991 = vrot.slane %v2714, %v2990
    %v2992 = vsel %vm2816, %v2991, %v2987
    %v2993 = vlaneseq
    %v2994 = vshrl.u32 %v2993, 7
    %v2995 = vsub.s32 %v2818, %v2994
    %v2996 = vrot.slane %v2715, %v2995
    %v2997 = vsel %vm2823, %v2996, %v2992
    %v2998 = vlaneseq
    %v2999 = vshrl.u32 %v2998, 7
    %v3000 = vsub.s32 %v2825, %v2999
    %v3001 = vrot.slane %v2716, %v3000
    %v3002 = vsel %vm2830, %v3001, %v2997
    %v3003 = vlaneseq
    %v3004 = vshrl.u32 %v3003, 7
    %v3005 = vsub.s32 %v2806, %v3004
    %v3006 = vrot.slane %v2717, %v3005
    %v3007 = vlaneseq
    %v3008 = vshrl.u32 %v3007, 7
    %v3009 = vsub.s32 %v2811, %v3008
    %v3010 = vrot.slane %v2718, %v3009
    %v3011 = vsel %vm2816, %v3010, %v3006
    %v3012 = vlaneseq
    %v3013 = vshrl.u32 %v3012, 7
    %v3014 = vsub.s32 %v2818, %v3013
    %v3015 = vrot.slane %v2719, %v3014
    %v3016 = vsel %vm2823, %v3015, %v3011
    %v3017 = vlaneseq
    %v3018 = vshrl.u32 %v3017, 7
    %v3019 = vsub.s32 %v2825, %v3018
    %v3020 = vrot.slane %v2720, %v3019
    %v3021 = vsel %vm2830, %v3020, %v3016
    %v3022 = vlaneseq
    %v3023 = vshrl.u32 %v3022, 7
    %v3024 = vsub.s32 %v2806, %v3023
    %v3025 = vrot.slane %v2721, %v3024
    %v3026 = vlaneseq
    %v3027 = vshrl.u32 %v3026, 7
    %v3028 = vsub.s32 %v2811, %v3027
    %v3029 = vrot.slane %v2722, %v3028
    %v3030 = vsel %vm2816, %v3029, %v3025
    %v3031 = vlaneseq
    %v3032 = vshrl.u32 %v3031, 7
    %v3033 = vsub.s32 %v2818, %v3032
    %v3034 = vrot.slane %v2723, %v3033
    %v3035 = vsel %vm2823, %v3034, %v3030
    %v3036 = vlaneseq
    %v3037 = vshrl.u32 %v3036, 7
    %v3038 = vsub.s32 %v2825, %v3037
    %v3039 = vrot.slane %v2724, %v3038
    %v3040 = vsel %vm2830, %v3039, %v3035
    %v3041 = vlaneseq
    %v3042 = vshrl.u32 %v3041, 7
    %v3043 = vsub.s32 %v2806, %v3042
    %v3044 = vrot.slane %v2725, %v3043
    %v3045 = vlaneseq
    %v3046 = vshrl.u32 %v3045, 7
    %v3047 = vsub.s32 %v2811, %v3046
    %v3048 = vrot.slane %v2726, %v3047
    %v3049 = vsel %vm2816, %v3048, %v3044
    %v3050 = vlaneseq
    %v3051 = vshrl.u32 %v3050, 7
    %v3052 = vsub.s32 %v2818, %v3051
    %v3053 = vrot.slane %v2727, %v3052
    %v3054 = vsel %vm2823, %v3053, %v3049
    %v3055 = vlaneseq
    %v3056 = vshrl.u32 %v3055, 7
    %v3057 = vsub.s32 %v2825, %v3056
    %v3058 = vrot.slane %v2728, %v3057
    %v3059 = vsel %vm2830, %v3058, %v3054
    %v3060 = vlaneseq
    %v3061 = vshrl.u32 %v3060, 7
    %v3062 = vsub.s32 %v2806, %v3061
    %v3063 = vrot.slane %v2729, %v3062
    %v3064 = vlaneseq
    %v3065 = vshrl.u32 %v3064, 7
    %v3066 = vsub.s32 %v2811, %v3065
    %v3067 = vrot.slane %v2730, %v3066
    %v3068 = vsel %vm2816, %v3067, %v3063
    %v3069 = vlaneseq
    %v3070 = vshrl.u32 %v3069, 7
    %v3071 = vsub.s32 %v2818, %v3070
    %v3072 = vrot.slane %v2731, %v3071
    %v3073 = vsel %vm2823, %v3072, %v3068
    %v3074 = vlaneseq
    %v3075 = vshrl.u32 %v3074, 7
    %v3076 = vsub.s32 %v2825, %v3075
    %v3077 = vrot.slane %v2732, %v3076
    %v3078 = vsel %vm2830, %v3077, %v3073
    %v3079 = vlaneseq
    %v3080 = vshrl.u32 %v3079, 7
    %v3081 = vsub.s32 %v2806, %v3080
    %v3082 = vrot.slane %v2733, %v3081
    %v3083 = vlaneseq
    %v3084 = vshrl.u32 %v3083, 7
    %v3085 = vsub.s32 %v2811, %v3084
    %v3086 = vrot.slane %v2734, %v3085
    %v3087 = vsel %vm2816, %v3086, %v3082
    %v3088 = vlaneseq
    %v3089 = vshrl.u32 %v3088, 7
    %v3090 = vsub.s32 %v2818, %v3089
    %v3091 = vrot.slane %v2735, %v3090
    %v3092 = vsel %vm2823, %v3091, %v3087
    %v3093 = vlaneseq
    %v3094 = vshrl.u32 %v3093, 7
    %v3095 = vsub.s32 %v2825, %v3094
    %v3096 = vrot.slane %v2736, %v3095
    %v3097 = vsel %vm2830, %v3096, %v3092
    %v3098 = vlaneseq
    %v3099 = vshrl.u32 %v3098, 7
    %v3100 = vsub.s32 %v2806, %v3099
    %v3101 = vrot.slane %v2737, %v3100
    %v3102 = vlaneseq
    %v3103 = vshrl.u32 %v3102, 7
    %v3104 = vsub.s32 %v2811, %v3103
    %v3105 = vrot.slane %v2738, %v3104
    %v3106 = vsel %vm2816, %v3105, %v3101
    %v3107 = vlaneseq
    %v3108 = vshrl.u32 %v3107, 7
    %v3109 = vsub.s32 %v2818, %v3108
    %v3110 = vrot.slane %v2739, %v3109
    %v3111 = vsel %vm2823, %v3110, %v3106
    %v3112 = vlaneseq
    %v3113 = vshrl.u32 %v3112, 7
    %v3114 = vsub.s32 %v2825, %v3113
    %v3115 = vrot.slane %v2740, %v3114
    %v3116 = vsel %vm2830, %v3115, %v3111
    %vm3117 = vcmask 1041409
    %v3118 = vsel %vm3117, %v2850, %v2831
    %vm3119 = vcmask 1042434
    %v3120 = vsel %vm3119, %v2869, %v3118
    %vm3121 = vcmask 1043459
    %v3122 = vsel %vm3121, %v2888, %v3120
    %vm3123 = vcmask 1044484
    %v3124 = vsel %vm3123, %v2907, %v3122
    %vm3125 = vcmask 1045509
    %v3126 = vsel %vm3125, %v2926, %v3124
    %vm3127 = vcmask 1046534
    %v3128 = vsel %vm3127, %v2945, %v3126
    %vm3129 = vcmask 1047559
    %v3130 = vsel %vm3129, %v2964, %v3128
    %v3131 = vsel %vm3117, %v3002, %v2983
    %v3132 = vsel %vm3119, %v3021, %v3131
    %v3133 = vsel %vm3121, %v3040, %v3132
    %v3134 = vsel %vm3123, %v3059, %v3133
    %v3135 = vsel %vm3125, %v3078, %v3134
    %v3136 = vsel %vm3127, %v3097, %v3135
    %v3137 = vsel %vm3129, %v3116, %v3136
    %3140 = vst.msk [vmem:[#allocation8] sm:$0xff] %vm77, %v3130
    %3141 = vst.msk [vmem:[#allocation8 + $0x8] sm:$0xff] %vm77, %v3137
    // Predicated region
    $region30: #{tpu_custom_call.1} parent=1 // pred_check
      _
    $region31: #{tpu_custom_call.1} parent=1 // pred_check_branch
      %3143 = sbr.rel (0) target = $region33
    $region32: #{tpu_custom_call.1} parent=1 // pred_region
      %s3145 = ssub.s32 256, 256
      %3146 = vsyncadd [#allocation5], %s3145
      %s3147 = sshll.u32 [#allocation8], 4
      %s3148 = int_to_ptr.vmem [resolvable:$true] %s3147
      %3153 = dma.vmem_to_hbm [thread:$0]  %s3148, 256, %s5, [#allocation5], 128, 128, 8
    $region33: #{tpu_custom_call.1} parent=1 // pred_fallthru
      _
    // Predicated region
    $region34: #{tpu_custom_call.1} parent=1 // pred_check
      _
    $region35: #{tpu_custom_call.1} parent=1 // pred_check_branch
      %3155 = sbr.rel (0) target = $region37
    $region36: #{tpu_custom_call.1} parent=1 // pred_region
      %3156 = dma.done [#allocation5], 256
    $region37: #{tpu_custom_call.1} parent=1 // pred_fallthru
      _
    %3157 = vsyncpa [#allocation4], 1
    %3158 = vsyncpa [#allocation7], 1
    %3159 = vsyncpa [#allocation5], 1

</llo_original>
